<compile_context>
chip_gen: v7x
topology: tpu7x:2x2x1
jax: 0.10.0
libtpu: 0.0.40
codegen_flags: <defaults>
</compile_context>

<pallas_src>
import numpy as np
import jax
import jax.numpy as jnp
from jax.experimental import pallas as pl
from jax.experimental.pallas import tpu as pltpu

IMG = 192                        # spatial size (H == W)
LEVELS = 5
POOL = 6                         # adaptive-pool target = IMG // 2**LEVELS
ROW_BLK = 2 * POOL               # 12 : rows/cols of one level's pooled subband block
PACK_ROWS = 16                   # 12 padded up to a multiple of 8 (sublane aligned)
COL_BLK = ROW_BLK * LEVELS       # 60 : lane extent of the packed per-image feature block
FEAT = 4 * LEVELS * POOL * POOL  # 720 : torch feature count (20 channels * 6 * 6)
PACK_FEAT = PACK_ROWS * COL_BLK  # 960 : flattened packed feature length (zero-padded)
MAX_TB = 16                      # per-grid-step image block (VMEM-safe on all generations)


# ---------------------------------------------------------------------------
# host-side constant construction
# ---------------------------------------------------------------------------
def _haar_matrices(size):
    """1-D orthonormal Haar analysis matrices (low, high), each (size//2, size)."""
    half = size // 2
    wl = np.zeros((half, size), dtype=np.float64)
    wh = np.zeros((half, size), dtype=np.float64)
    s = 1.0 / np.sqrt(2.0)
    for i in range(half):
        wl[i, 2 * i] = s
        wl[i, 2 * i + 1] = s
        wh[i, 2 * i] = s
        wh[i, 2 * i + 1] = -s
    return wl, wh


def _pool_matrix(size_in, size_out):
    """Uniform average-pooling matrix (size_out, size_in); size_in % size_out == 0."""
    m = size_in // size_out
    p = np.zeros((size_out, size_in), dtype=np.float64)
    for i in range(size_out):
        p[i, i * m:(i + 1) * m] = 1.0 / m
    return p


def _build_dwt_constants():
    """Fold the recursive LL chain into direct per-level matrices:
         B_k (12, 192) = [P@Wl ; P@Wh]_k @ Wl_{k-1} @ ... @ Wl_0
       so the level-k pooled 12x12 block (LL/LH/HL/HH quadrants) is B_k @ x @ B_k^T.
       Returns:
         ball  (60, 192) : vstack of B_k                     -> right operand = ball.T
         bpad  (80, 192) : B_k placed at rows 16k..16k+12 (4 zero pad rows per level),
                           so sublane slicing stays 8-aligned in-kernel
         lmask (80, 60)  : 1 at level-matched (block-diagonal) positions, 0 elsewhere
    """
    bs = []
    chain = np.eye(IMG, dtype=np.float64)
    for k in range(LEVELS):
        s = IMG >> k
        wl, wh = _haar_matrices(s)
        p = _pool_matrix(s // 2, POOL)
        a = np.vstack([p @ wl, p @ wh])            # (12, s)
        bs.append(a @ chain)                       # (12, 192)
        if k < LEVELS - 1:
            chain = wl @ chain                     # (s//2, 192)
    ball = np.vstack(bs).astype(np.float32)                                 # (60, 192)
    bpad = np.zeros((LEVELS * PACK_ROWS, IMG), dtype=np.float32)            # (80, 192)
    lmask = np.zeros((LEVELS * PACK_ROWS, COL_BLK), dtype=np.float32)       # (80, 60)
    for k in range(LEVELS):
        bpad[k * PACK_ROWS:k * PACK_ROWS + ROW_BLK] = bs[k].astype(np.float32)
        lmask[k * PACK_ROWS:k * PACK_ROWS + ROW_BLK,
              k * ROW_BLK:(k + 1) * ROW_BLK] = 1.0
    return ball, bpad, lmask


def _w1_pack_indices():
    """Mapping packed-feature index f = a*60 + (12k + b) -> PyTorch flatten index
       t = (k*4 + band_row*2 + band_col)*36 + h*6 + w, with a = band_row*6 + h (left index)
       and b = band_col*6 + w (right index).  Pad rows a in [12,16) are invalid (zeroed)."""
    idx = np.zeros(PACK_FEAT, dtype=np.int32)
    valid = np.zeros(PACK_FEAT, dtype=np.float32)
    for k in range(LEVELS):
        for a in range(ROW_BLK):
            br, h = divmod(a, POOL)
            for b in range(ROW_BLK):
                bc, w = divmod(b, POOL)
                tidx = (k * 4 + br * 2 + bc) * (POOL * POOL) + h * POOL + w
                f = a * COL_BLK + k * ROW_BLK + b
                idx[f] = tidx
                valid[f] = 1.0
    return idx, valid


# ---------------------------------------------------------------------------
# fused Pallas kernel: 5-level Haar DWT + pool-to-6x6 + MLP classifier
# ---------------------------------------------------------------------------
def fused_kernel(x_ref, ballT_ref, bpad_ref, lmask_ref,
                 w1_ref, b1_ref, w2_ref, b2_ref, w3_ref, b3_ref, out_ref):
    """x_ref   : (1, tb*192, 192)  image block (images stacked along rows)
       ballT   : (192, 60)         B_all^T (bf16 or f32)
       bpad    : (80, 192) f32     row-padded B_all
       lmask   : (80, 60)  f32     block-diagonal selection mask
       w1      : (960, 150) f32    permuted / zero-padded layer-1 weight
       out_ref : (1, tb, 2) f32
    """
    tb = out_ref.shape[1]

    # --- right analysis: one big matmul, M = tb*192 ---------------------------------
    xf = x_ref[0]                                                        # (tb*192, 192)
    y = jnp.dot(xf, ballT_ref[...], preferred_element_type=jnp.float32)  # (tb*192, 60)
    y3 = y.reshape(tb, IMG, COL_BLK)                                     # (tb, 192, 60)

    # --- left analysis: one batched matmul over the tile -----------------------------
    bpad_b = jnp.broadcast_to(bpad_ref[...], (tb,) + bpad_ref.shape)     # (tb, 80, 192)
    full = jnp.einsum('bpi,biq->bpq', bpad_b, y3,
                      preferred_element_type=jnp.float32)                # (tb, 80, 60)

    # keep level-matched (block-diagonal) entries, collapse the 5 level row-groups
    full = full * lmask_ref[...][None, :, :]
    feat = full[:, 0:PACK_ROWS, :]
    for k in range(1, LEVELS):
        feat = feat + full[:, k * PACK_ROWS:(k + 1) * PACK_ROWS, :]      # (tb, 16, 60)
    featf = feat.reshape(tb, PACK_FEAT)                                  # (tb, 960)

    # --- classifier (Dropout = eval identity), batched over the tile -----------------
    h = jnp.dot(featf, w1_ref[...], preferred_element_type=jnp.float32) + b1_ref[...]
    h = jnp.maximum(h, 0.0)
    h = jnp.dot(h, w2_ref[...], preferred_element_type=jnp.float32) + b2_ref[...]
    h = jnp.maximum(h, 0.0)
    logits = jnp.dot(h, w3_ref[...], preferred_element_type=jnp.float32) + b3_ref[...]
    out_ref[0] = logits                                                  # one store/step


# ---------------------------------------------------------------------------
# forward wrapper
# ---------------------------------------------------------------------------
def _choose_tb(batch):
    """Largest per-step image block: single grid step whenever the batch fits (grid steps
    are pure overhead on single-TC chips and shrink every matmul's M dimension)."""
    if batch <= MAX_TB:
        return batch
    best = 1
    for t in range(2, MAX_TB + 1):
        if batch % t == 0:
            best = t
    return best


def incept_wave5_forward(x, params, *, use_bf16=True):
    """x: (B, 1, 192, 192) float32 (NCHW). Returns (B, 2) float32 logits."""
    assert x.ndim == 4 and x.shape[1] == 1 and x.shape[2] == IMG and x.shape[3] == IMG
    B = x.shape[0]
    tb = _choose_tb(B)
    nb = B // tb
    in_dtype = jnp.bfloat16 if use_bf16 else jnp.float32
    # images of one block stacked along rows -> kernel needs no in-kernel merge reshape
    img = x[:, 0, :, :].reshape(nb, tb * IMG, IMG).astype(in_dtype)

    ball, bpad, lmask = _build_dwt_constants()
    ballT = jnp.asarray(np.ascontiguousarray(ball.T), dtype=in_dtype)    # (192, 60)
    bpad_j = jnp.asarray(bpad)                                           # (80, 192)
    lmask_j = jnp.asarray(lmask)                                         # (80, 60)

    w1, b1, w2, b2, w3, b3 = params
    idx, valid = _w1_pack_indices()
    w1p = (jnp.take(jnp.asarray(w1, jnp.float32), jnp.asarray(idx), axis=0)
           * jnp.asarray(valid)[:, None])                                # (960, 150)

    operands = [img, ballT, bpad_j, lmask_j, w1p,
                jnp.asarray(b1, jnp.float32), jnp.asarray(w2, jnp.float32),
                jnp.asarray(b2, jnp.float32), jnp.asarray(w3, jnp.float32),
                jnp.asarray(b3, jnp.float32)]

    def _const_spec(a):
        zeros = (0,) * a.ndim
        return pl.BlockSpec(a.shape, lambda b, _z=zeros: _z)

    in_specs = [pl.BlockSpec((1, tb * IMG, IMG), lambda b: (b, 0, 0))]
    in_specs += [_const_spec(a) for a in operands[1:]]

    out = pl.pallas_call(
        fused_kernel,
        out_shape=jax.ShapeDtypeStruct((nb, tb, 2), jnp.float32),
        grid=(nb,),
        in_specs=in_specs,
        out_specs=pl.BlockSpec((1, tb, 2), lambda b: (b, 0, 0)),
        compiler_params=pltpu.CompilerParams(
            dimension_semantics=("parallel",),
            vmem_limit_bytes=32 * 1024 * 1024),
    )(*operands)
    return out.reshape(B, 2)


def init_classifier_params(key):
    """Deterministic PyTorch-style Linear init (uniform +/- 1/sqrt(fan_in)).
    Weights stored as (in, out) so the kernel computes x @ W."""
    def linear(kw, kb, fan_in, fan_out):
        bound = 1.0 / np.sqrt(fan_in)
        w = jax.random.uniform(kw, (fan_in, fan_out), jnp.float32, -bound, bound)
        b = jax.random.uniform(kb, (1, fan_out), jnp.float32, -bound, bound)
        return w, b

    k1, k2, k3, k4, k5, k6 = jax.random.split(key, 6)
    w1, b1 = linear(k1, k2, FEAT, 150)
    w2, b2 = linear(k3, k4, 150, 50)
    w3, b3 = linear(k5, k6, 50, 2)
    return (w1, b1, w2, b2, w3, b3)


if __name__ == "__main__":
    root = jax.random.PRNGKey(0)
    k_params, k_x = jax.random.split(root)

    params = init_classifier_params(k_params)
    x = jax.random.normal(k_x, (2, 1, IMG, IMG), dtype=jnp.float32)

    out = jax.block_until_ready(incept_wave5_forward(x, params))
    assert out.shape == (2, 2) and out.dtype == jnp.float32
    print("KERNEL_OK")
</pallas_src>

<mosaic_0001>
module attributes {stable_mosaic.version = 11 : i64} {
  func.func @fused_kernel(%arg0: i32, %arg1: memref<1x384x192xbf16, #tpu.memory_space<vmem>>, %arg2: memref<192x60xbf16, #tpu.memory_space<vmem>>, %arg3: memref<80x192xf32, #tpu.memory_space<vmem>>, %arg4: memref<80x60xf32, #tpu.memory_space<vmem>>, %arg5: memref<960x150xf32, #tpu.memory_space<vmem>>, %arg6: memref<1x150xf32, #tpu.memory_space<vmem>>, %arg7: memref<150x50xf32, #tpu.memory_space<vmem>>, %arg8: memref<1x50xf32, #tpu.memory_space<vmem>>, %arg9: memref<50x2xf32, #tpu.memory_space<vmem>>, %arg10: memref<1x2xf32, #tpu.memory_space<vmem>>, %arg11: memref<1x2x2xf32, #tpu.memory_space<vmem>>) attributes {dimension_semantics = [#tpu.dimension_semantics<parallel>], iteration_bounds = array<i64: 1>, scalar_prefetch = 0 : i64, scratch_operands = 0 : i64, tpu.core_type = #tpu.core_type<tc>, window_params = [{transform_indices = @transform_0, window_bounds = array<i64: 1, 384, 192>}, {pipeline_mode = #tpu.pipeline_mode<synchronous>, transform_indices = @transform_1, window_bounds = array<i64: 192, 60>}, {pipeline_mode = #tpu.pipeline_mode<synchronous>, transform_indices = @transform_2, window_bounds = array<i64: 80, 192>}, {pipeline_mode = #tpu.pipeline_mode<synchronous>, transform_indices = @transform_3, window_bounds = array<i64: 80, 60>}, {pipeline_mode = #tpu.pipeline_mode<synchronous>, transform_indices = @transform_4, window_bounds = array<i64: 960, 150>}, {pipeline_mode = #tpu.pipeline_mode<synchronous>, transform_indices = @transform_5, window_bounds = array<i64: 1, 150>}, {pipeline_mode = #tpu.pipeline_mode<synchronous>, transform_indices = @transform_6, window_bounds = array<i64: 150, 50>}, {pipeline_mode = #tpu.pipeline_mode<synchronous>, transform_indices = @transform_7, window_bounds = array<i64: 1, 50>}, {pipeline_mode = #tpu.pipeline_mode<synchronous>, transform_indices = @transform_8, window_bounds = array<i64: 50, 2>}, {pipeline_mode = #tpu.pipeline_mode<synchronous>, transform_indices = @transform_9, window_bounds = array<i64: 1, 2>}, {transform_indices = @transform_10, window_bounds = array<i64: 1, 2, 2>}]} {
    %c0 = arith.constant 0 : index
    %c0_0 = arith.constant 0 : index
    %c0_1 = arith.constant 0 : index
    %0 = vector.load %arg1[%c0, %c0_0, %c0_1] : memref<1x384x192xbf16, #tpu.memory_space<vmem>>, vector<1x384x192xbf16>
    %1 = vector.shape_cast %0 : vector<1x384x192xbf16> to vector<384x192xbf16>
    %c0_2 = arith.constant 0 : index
    %c0_3 = arith.constant 0 : index
    %2 = vector.load %arg2[%c0_2, %c0_3] : memref<192x60xbf16, #tpu.memory_space<vmem>>, vector<192x60xbf16>
    %cst = arith.constant dense<0.000000e+00> : vector<384x60xf32>
    %3 = tpu.matmul %1, %2, %cst {dimension_numbers = #tpu.dot_dimension_numbers<[1], [0], [0], [1], [0, 0, 1, 1], [], []>} : vector<384x192xbf16>, vector<192x60xbf16>, vector<384x60xf32> -> vector<384x60xf32>
    %4 = vector.shape_cast %3 : vector<384x60xf32> to vector<2x192x60xf32>
    %c0_4 = arith.constant 0 : index
    %c0_5 = arith.constant 0 : index
    %5 = vector.load %arg3[%c0_4, %c0_5] : memref<80x192xf32, #tpu.memory_space<vmem>>, vector<80x192xf32>
    %6 = vector.shape_cast %5 : vector<80x192xf32> to vector<1x80x192xf32>
    %7 = vector.broadcast %6 : vector<1x80x192xf32> to vector<2x80x192xf32>
    "tpu.trace_start"() <{level = 10 : i32, message = "bpi,biq->bpq"}> : () -> ()
    %cst_6 = arith.constant dense<0.000000e+00> : vector<2x80x60xf32>
    %8 = tpu.matmul %7, %4, %cst_6 {dimension_numbers = #tpu.dot_dimension_numbers<[2], [1], [1], [2], [0, 0, 0, 1, 1, 2], [0], [0]>} : vector<2x80x192xf32>, vector<2x192x60xf32>, vector<2x80x60xf32> -> vector<2x80x60xf32>
    "tpu.trace_stop"() : () -> ()
    %c0_7 = arith.constant 0 : index
    %c0_8 = arith.constant 0 : index
    %9 = vector.load %arg4[%c0_7, %c0_8] : memref<80x60xf32, #tpu.memory_space<vmem>>, vector<80x60xf32>
    %10 = vector.shape_cast %9 : vector<80x60xf32> to vector<1x80x60xf32>
    %11 = vector.broadcast %10 : vector<1x80x60xf32> to vector<2x80x60xf32>
    %12 = arith.mulf %8, %11 : vector<2x80x60xf32>
    %13 = vector.extract_strided_slice %12 {offsets = [0, 0, 0], sizes = [2, 16, 60], strides = [1, 1, 1]} : vector<2x80x60xf32> to vector<2x16x60xf32>
    %14 = vector.extract_strided_slice %12 {offsets = [0, 16, 0], sizes = [2, 16, 60], strides = [1, 1, 1]} : vector<2x80x60xf32> to vector<2x16x60xf32>
    %15 = arith.addf %13, %14 : vector<2x16x60xf32>
    %16 = vector.extract_strided_slice %12 {offsets = [0, 32, 0], sizes = [2, 16, 60], strides = [1, 1, 1]} : vector<2x80x60xf32> to vector<2x16x60xf32>
    %17 = arith.addf %15, %16 : vector<2x16x60xf32>
    %18 = vector.extract_strided_slice %12 {offsets = [0, 48, 0], sizes = [2, 16, 60], strides = [1, 1, 1]} : vector<2x80x60xf32> to vector<2x16x60xf32>
    %19 = arith.addf %17, %18 : vector<2x16x60xf32>
    %20 = vector.extract_strided_slice %12 {offsets = [0, 64, 0], sizes = [2, 16, 60], strides = [1, 1, 1]} : vector<2x80x60xf32> to vector<2x16x60xf32>
    %21 = arith.addf %19, %20 : vector<2x16x60xf32>
    %22 = vector.shape_cast %21 : vector<2x16x60xf32> to vector<2x960xf32>
    %c0_9 = arith.constant 0 : index
    %c0_10 = arith.constant 0 : index
    %23 = vector.load %arg5[%c0_9, %c0_10] : memref<960x150xf32, #tpu.memory_space<vmem>>, vector<960x150xf32>
    %cst_11 = arith.constant dense<0.000000e+00> : vector<2x150xf32>
    %24 = tpu.matmul %22, %23, %cst_11 {dimension_numbers = #tpu.dot_dimension_numbers<[1], [0], [0], [1], [0, 0, 1, 1], [], []>} : vector<2x960xf32>, vector<960x150xf32>, vector<2x150xf32> -> vector<2x150xf32>
    %c0_12 = arith.constant 0 : index
    %c0_13 = arith.constant 0 : index
    %25 = vector.load %arg6[%c0_12, %c0_13] : memref<1x150xf32, #tpu.memory_space<vmem>>, vector<1x150xf32>
    %26 = vector.broadcast %25 : vector<1x150xf32> to vector<2x150xf32>
    %27 = arith.addf %24, %26 : vector<2x150xf32>
    %cst_14 = arith.constant 0.000000e+00 : f32
    %28 = vector.broadcast %cst_14 : f32 to vector<2x150xf32>
    %29 = arith.maximumf %27, %28 : vector<2x150xf32>
    %c0_15 = arith.constant 0 : index
    %c0_16 = arith.constant 0 : index
    %30 = vector.load %arg7[%c0_15, %c0_16] : memref<150x50xf32, #tpu.memory_space<vmem>>, vector<150x50xf32>
    %cst_17 = arith.constant dense<0.000000e+00> : vector<2x50xf32>
    %31 = tpu.matmul %29, %30, %cst_17 {dimension_numbers = #tpu.dot_dimension_numbers<[1], [0], [0], [1], [0, 0, 1, 1], [], []>} : vector<2x150xf32>, vector<150x50xf32>, vector<2x50xf32> -> vector<2x50xf32>
    %c0_18 = arith.constant 0 : index
    %c0_19 = arith.constant 0 : index
    %32 = vector.load %arg8[%c0_18, %c0_19] : memref<1x50xf32, #tpu.memory_space<vmem>>, vector<1x50xf32>
    %33 = vector.broadcast %32 : vector<1x50xf32> to vector<2x50xf32>
    %34 = arith.addf %31, %33 : vector<2x50xf32>
    %cst_20 = arith.constant 0.000000e+00 : f32
    %35 = vector.broadcast %cst_20 : f32 to vector<2x50xf32>
    %36 = arith.maximumf %34, %35 : vector<2x50xf32>
    %c0_21 = arith.constant 0 : index
    %c0_22 = arith.constant 0 : index
    %37 = vector.load %arg9[%c0_21, %c0_22] : memref<50x2xf32, #tpu.memory_space<vmem>>, vector<50x2xf32>
    %cst_23 = arith.constant dense<0.000000e+00> : vector<2x2xf32>
    %38 = tpu.matmul %36, %37, %cst_23 {dimension_numbers = #tpu.dot_dimension_numbers<[1], [0], [0], [1], [0, 0, 1, 1], [], []>} : vector<2x50xf32>, vector<50x2xf32>, vector<2x2xf32> -> vector<2x2xf32>
    %c0_24 = arith.constant 0 : index
    %c0_25 = arith.constant 0 : index
    %39 = vector.load %arg10[%c0_24, %c0_25] : memref<1x2xf32, #tpu.memory_space<vmem>>, vector<1x2xf32>
    %40 = vector.broadcast %39 : vector<1x2xf32> to vector<2x2xf32>
    %41 = arith.addf %38, %40 : vector<2x2xf32>
    %c0_26 = arith.constant 0 : index
    %c0_27 = arith.constant 0 : index
    %c0_28 = arith.constant 0 : index
    %42 = vector.load %arg11[%c0_26, %c0_27, %c0_28] : memref<1x2x2xf32, #tpu.memory_space<vmem>>, vector<1x2x2xf32>
    %43 = vector.shape_cast %42 : vector<1x2x2xf32> to vector<2x2xf32>
    %44 = vector.shape_cast %41 : vector<2x2xf32> to vector<1x2x2xf32>
    tpu.vector_store %arg11[%c0_26, %c0_27, %c0_28], %44 {strides = array<i32>} : memref<1x2x2xf32, #tpu.memory_space<vmem>>, vector<1x2x2xf32>,
    return
  }
  func.func @transform_0(%arg0: i32) -> (i32, i32, i32) {
    %c0_i32 = arith.constant 0 : i32
    %c0_i32_0 = arith.constant 0 : i32
    %c0_i32_1 = arith.constant 0 : i32
    return %arg0, %c0_i32, %c0_i32_0 : i32, i32, i32
  }
  func.func @transform_1(%arg0: i32) -> (i32, i32) {
    %c0_i32 = arith.constant 0 : i32
    %c0_i32_0 = arith.constant 0 : i32
    %c0_i32_1 = arith.constant 0 : i32
    return %c0_i32, %c0_i32_0 : i32, i32
  }
  func.func @transform_2(%arg0: i32) -> (i32, i32) {
    %c0_i32 = arith.constant 0 : i32
    %c0_i32_0 = arith.constant 0 : i32
    %c0_i32_1 = arith.constant 0 : i32
    return %c0_i32, %c0_i32_0 : i32, i32
  }
  func.func @transform_3(%arg0: i32) -> (i32, i32) {
    %c0_i32 = arith.constant 0 : i32
    %c0_i32_0 = arith.constant 0 : i32
    %c0_i32_1 = arith.constant 0 : i32
    return %c0_i32, %c0_i32_0 : i32, i32
  }
  func.func @transform_4(%arg0: i32) -> (i32, i32) {
    %c0_i32 = arith.constant 0 : i32
    %c0_i32_0 = arith.constant 0 : i32
    %c0_i32_1 = arith.constant 0 : i32
    return %c0_i32, %c0_i32_0 : i32, i32
  }
  func.func @transform_5(%arg0: i32) -> (i32, i32) {
    %c0_i32 = arith.constant 0 : i32
    %c0_i32_0 = arith.constant 0 : i32
    %c0_i32_1 = arith.constant 0 : i32
    return %c0_i32, %c0_i32_0 : i32, i32
  }
  func.func @transform_6(%arg0: i32) -> (i32, i32) {
    %c0_i32 = arith.constant 0 : i32
    %c0_i32_0 = arith.constant 0 : i32
    %c0_i32_1 = arith.constant 0 : i32
    return %c0_i32, %c0_i32_0 : i32, i32
  }
  func.func @transform_7(%arg0: i32) -> (i32, i32) {
    %c0_i32 = arith.constant 0 : i32
    %c0_i32_0 = arith.constant 0 : i32
    %c0_i32_1 = arith.constant 0 : i32
    return %c0_i32, %c0_i32_0 : i32, i32
  }
  func.func @transform_8(%arg0: i32) -> (i32, i32) {
    %c0_i32 = arith.constant 0 : i32
    %c0_i32_0 = arith.constant 0 : i32
    %c0_i32_1 = arith.constant 0 : i32
    return %c0_i32, %c0_i32_0 : i32, i32
  }
  func.func @transform_9(%arg0: i32) -> (i32, i32) {
    %c0_i32 = arith.constant 0 : i32
    %c0_i32_0 = arith.constant 0 : i32
    %c0_i32_1 = arith.constant 0 : i32
    return %c0_i32, %c0_i32_0 : i32, i32
  }
  func.func @transform_10(%arg0: i32) -> (i32, i32, i32) {
    %c0_i32 = arith.constant 0 : i32
    %c0_i32_0 = arith.constant 0 : i32
    %c0_i32_1 = arith.constant 0 : i32
    return %arg0, %c0_i32, %c0_i32_0 : i32, i32, i32
  }
}

</mosaic_0001>

<llo_original>
// kernel: tpu_custom_call.1
$region0: #{tpu_custom_call.1}
  #allocation0 [shape = 'u32[]', space=smem, size = 0x4, offset = 0x4, fixed_abs, tag = 'smem constant byte address 0x4 - core index']
  #allocation1 [shape = 'u32[144,128]{1,0:T(1,128)}', space=vmem, size = 0x12000, scoped, tag = 'internal scratch']
  %s0 = inlined_call_operand.vmem [shape: bf16[1,384,192], index: 0, kind: input, shape index: {}]
  %s1 = inlined_call_operand.vmem [shape: bf16[192,60], index: 1, kind: input, shape index: {}]
  %s2 = inlined_call_operand.vmem [shape: f32[80,192], index: 2, kind: input, shape index: {}]
  %s3 = inlined_call_operand.vmem [shape: f32[80,60], index: 3, kind: input, shape index: {}]
  %s4 = inlined_call_operand.vmem [shape: f32[960,150], index: 4, kind: input, shape index: {}]
  %s5 = inlined_call_operand.vmem [shape: f32[1,150], index: 5, kind: input, shape index: {}]
  %s6 = inlined_call_operand.vmem [shape: f32[150,50], index: 6, kind: input, shape index: {}]
  %s7 = inlined_call_operand.vmem [shape: f32[1,50], index: 7, kind: input, shape index: {}]
  %s8 = inlined_call_operand.vmem [shape: f32[50,2], index: 8, kind: input, shape index: {}]
  %s9 = inlined_call_operand.vmem [shape: f32[1,2], index: 9, kind: input, shape index: {}]
  %s10 = inlined_call_operand.hbm [shape: f32[1,2,2], index: 10, kind: output, shape index: {}]
  %s11 = sld [smem:[#allocation0]]
  $region50: #{tpu_custom_call.1} parent=0
    _
  %s13 = ssub.s32 1, %s11
  %s14 = scalar_select 0, %s13, %s11
  $region1: #{tpu_custom_call.1} parent=0
    #allocation2 [shape = 'u8[1024]{0}', space=vmem, size = 0x400, scoped, tag = 'output window, operand 0, single buffered']
    #allocation3 [shape = 's32[1]{0}', space=sflag, size = 0x4, scoped, tag = 'scoped memory for tpu_custom_call.1']
    %15 = vsyncpa [#allocation3], 0
    // Predicated region
    $region2: #{tpu_custom_call.1} parent=1 // pred_check
      _
    $region3: #{tpu_custom_call.1} parent=1 // pred_check_branch
      %17 = sbr.rel (0) target = $region5
    $region4: #{tpu_custom_call.1} parent=1 // pred_region
      _
    $region5: #{tpu_custom_call.1} parent=1 // pred_fallthru
      _
    // Predicated region
    $region6: #{tpu_custom_call.1} parent=1 // pred_check
      _
    $region7: #{tpu_custom_call.1} parent=1 // pred_check_branch
      %19 = sbr.rel (0) target = $region9
    $region8: #{tpu_custom_call.1} parent=1 // pred_region
      _
    $region9: #{tpu_custom_call.1} parent=1 // pred_fallthru
      _
    // Predicated region
    $region10: #{tpu_custom_call.1} parent=1 // pred_check
      _
    $region11: #{tpu_custom_call.1} parent=1 // pred_check_branch
      %21 = sbr.rel (0) target = $region13
    $region12: #{tpu_custom_call.1} parent=1 // pred_region
      _
    $region13: #{tpu_custom_call.1} parent=1 // pred_fallthru
      _
    // Predicated region
    $region14: #{tpu_custom_call.1} parent=1 // pred_check
      _
    $region15: #{tpu_custom_call.1} parent=1 // pred_check_branch
      %23 = sbr.rel (0) target = $region17
    $region16: #{tpu_custom_call.1} parent=1 // pred_region
      _
    $region17: #{tpu_custom_call.1} parent=1 // pred_fallthru
      _
    // Predicated region
    $region18: #{tpu_custom_call.1} parent=1 // pred_check
      _
    $region19: #{tpu_custom_call.1} parent=1 // pred_check_branch
      %25 = sbr.rel (0) target = $region21
    $region20: #{tpu_custom_call.1} parent=1 // pred_region
      _
    $region21: #{tpu_custom_call.1} parent=1 // pred_fallthru
      _
    // Predicated region
    $region22: #{tpu_custom_call.1} parent=1 // pred_check
      _
    $region23: #{tpu_custom_call.1} parent=1 // pred_check_branch
      %27 = sbr.rel (0) target = $region25
    $region24: #{tpu_custom_call.1} parent=1 // pred_region
      _
    $region25: #{tpu_custom_call.1} parent=1 // pred_fallthru
      _
    // Predicated region
    $region26: #{tpu_custom_call.1} parent=1 // pred_check
      _
    $region27: #{tpu_custom_call.1} parent=1 // pred_check_branch
      %29 = sbr.rel (0) target = $region29
    $region28: #{tpu_custom_call.1} parent=1 // pred_region
      _
    $region29: #{tpu_custom_call.1} parent=1 // pred_fallthru
      _
    // Predicated region
    $region30: #{tpu_custom_call.1} parent=1 // pred_check
      _
    $region31: #{tpu_custom_call.1} parent=1 // pred_check_branch
      %31 = sbr.rel (0) target = $region33
    $region32: #{tpu_custom_call.1} parent=1 // pred_region
      _
    $region33: #{tpu_custom_call.1} parent=1 // pred_fallthru
      _
    // Predicated region
    $region34: #{tpu_custom_call.1} parent=1 // pred_check
      _
    $region35: #{tpu_custom_call.1} parent=1 // pred_check_branch
      %33 = sbr.rel (0) target = $region37
    $region36: #{tpu_custom_call.1} parent=1 // pred_region
      _
    $region37: #{tpu_custom_call.1} parent=1 // pred_fallthru
      _
    // Predicated region
    $region38: #{tpu_custom_call.1} parent=1 // pred_check
      _
    $region39: #{tpu_custom_call.1} parent=1 // pred_check_branch
      %35 = sbr.rel (0) target = $region41
    $region40: #{tpu_custom_call.1} parent=1 // pred_region
      _
    $region41: #{tpu_custom_call.1} parent=1 // pred_fallthru
      _
    %v37 = vld [vmem:[%s0] sm:$0xff]
    %v38 = vld [vmem:[%s0 + $0x8] sm:$0xff]
    %v39 = vld [vmem:[%s0 + $0x10] sm:$0xff]
    %v40 = vld [vmem:[%s0 + $0x18] sm:$0xff]
    %v41 = vld [vmem:[%s0 + $0x20] sm:$0xff]
    %v42 = vld [vmem:[%s0 + $0x28] sm:$0xff]
    %v43 = vld [vmem:[%s0 + $0x30] sm:$0xff]
    %v44 = vld [vmem:[%s0 + $0x38] sm:$0xff]
    %v45 = vld [vmem:[%s0 + $0x40] sm:$0xff]
    %v46 = vld [vmem:[%s0 + $0x48] sm:$0xff]
    %v47 = vld [vmem:[%s0 + $0x50] sm:$0xff]
    %v48 = vld [vmem:[%s0 + $0x58] sm:$0xff]
    %v49 = vld [vmem:[%s0 + $0x60] sm:$0xff]
    %v50 = vld [vmem:[%s0 + $0x68] sm:$0xff]
    %v51 = vld [vmem:[%s0 + $0x70] sm:$0xff]
    %v52 = vld [vmem:[%s0 + $0x78] sm:$0xff]
    %v53 = vld [vmem:[%s0 + $0x80] sm:$0xff]
    %v54 = vld [vmem:[%s0 + $0x88] sm:$0xff]
    %v55 = vld [vmem:[%s0 + $0x90] sm:$0xff]
    %v56 = vld [vmem:[%s0 + $0x98] sm:$0xff]
    %v57 = vld [vmem:[%s0 + $0xa0] sm:$0xff]
    %v58 = vld [vmem:[%s0 + $0xa8] sm:$0xff]
    %v59 = vld [vmem:[%s0 + $0xb0] sm:$0xff]
    %v60 = vld [vmem:[%s0 + $0xb8] sm:$0xff]
    %v61 = vld [vmem:[%s0 + $0xc0] sm:$0xff]
    %v62 = vld [vmem:[%s0 + $0xc8] sm:$0xff]
    %v63 = vld [vmem:[%s0 + $0xd0] sm:$0xff]
    %v64 = vld [vmem:[%s0 + $0xd8] sm:$0xff]
    %v65 = vld [vmem:[%s0 + $0xe0] sm:$0xff]
    %v66 = vld [vmem:[%s0 + $0xe8] sm:$0xff]
    %v67 = vld [vmem:[%s0 + $0xf0] sm:$0xff]
    %v68 = vld [vmem:[%s0 + $0xf8] sm:$0xff]
    %v69 = vld [vmem:[%s0 + $0x100] sm:$0xff]
    %v70 = vld [vmem:[%s0 + $0x108] sm:$0xff]
    %v71 = vld [vmem:[%s0 + $0x110] sm:$0xff]
    %v72 = vld [vmem:[%s0 + $0x118] sm:$0xff]
    %v73 = vld [vmem:[%s0 + $0x120] sm:$0xff]
    %v74 = vld [vmem:[%s0 + $0x128] sm:$0xff]
    %v75 = vld [vmem:[%s0 + $0x130] sm:$0xff]
    %v76 = vld [vmem:[%s0 + $0x138] sm:$0xff]
    %v77 = vld [vmem:[%s0 + $0x140] sm:$0xff]
    %v78 = vld [vmem:[%s0 + $0x148] sm:$0xff]
    %v79 = vld [vmem:[%s0 + $0x150] sm:$0xff]
    %v80 = vld [vmem:[%s0 + $0x158] sm:$0xff]
    %v81 = vld [vmem:[%s0 + $0x160] sm:$0xff]
    %v82 = vld [vmem:[%s0 + $0x168] sm:$0xff]
    %v83 = vld [vmem:[%s0 + $0x170] sm:$0xff]
    %v84 = vld [vmem:[%s0 + $0x178] sm:$0xff]
    %v85 = vld [vmem:[%s1] sm:$0xf]
    %v86 = vld [vmem:[%s1 + $0x4] sm:$0xf]
    %v87 = vld [vmem:[%s1 + $0x8] sm:$0xf]
    %v88 = vld [vmem:[%s1 + $0xc] sm:$0xf]
    %v89 = vld [vmem:[%s1 + $0x10] sm:$0xf]
    %v90 = vld [vmem:[%s1 + $0x14] sm:$0xf]
    %v91 = vld [vmem:[%s1 + $0x18] sm:$0xf]
    %v92 = vld [vmem:[%s1 + $0x1c] sm:$0xf]
    %v93 = vld [vmem:[%s1 + $0x20] sm:$0xf]
    %v94 = vld [vmem:[%s1 + $0x24] sm:$0xf]
    %v95 = vld [vmem:[%s1 + $0x28] sm:$0xf]
    %v96 = vld [vmem:[%s1 + $0x2c] sm:$0xf]
    %v97 = vld [vmem:[%s1 + $0x30] sm:$0xf]
    %v98 = vld [vmem:[%s1 + $0x34] sm:$0xf]
    %v99 = vld [vmem:[%s1 + $0x38] sm:$0xf]
    %v100 = vld [vmem:[%s1 + $0x3c] sm:$0xf]
    %v101 = vld [vmem:[%s1 + $0x40] sm:$0xf]
    %v102 = vld [vmem:[%s1 + $0x44] sm:$0xf]
    %v103 = vld [vmem:[%s1 + $0x48] sm:$0xf]
    %v104 = vld [vmem:[%s1 + $0x4c] sm:$0xf]
    %v105 = vld [vmem:[%s1 + $0x50] sm:$0xf]
    %v106 = vld [vmem:[%s1 + $0x54] sm:$0xf]
    %v107 = vld [vmem:[%s1 + $0x58] sm:$0xf]
    %v108 = vld [vmem:[%s1 + $0x5c] sm:$0xf]
    %v157 = vunpack.c.l.b16 %v37
    %v158 = vunpack.c.h.b16 %v37
    %v159 = vunpack.c.l.b16 %v38
    %v160 = vunpack.c.h.b16 %v38
    %v161 = vunpack.c.l.b16 %v39
    %v162 = vunpack.c.h.b16 %v39
    %v163 = vunpack.c.l.b16 %v40
    %v164 = vunpack.c.h.b16 %v40
    %v165 = vunpack.c.l.b16 %v41
    %v166 = vunpack.c.h.b16 %v41
    %v167 = vunpack.c.l.b16 %v42
    %v168 = vunpack.c.h.b16 %v42
    %v169 = vunpack.c.l.b16 %v43
    %v170 = vunpack.c.h.b16 %v43
    %v171 = vunpack.c.l.b16 %v44
    %v172 = vunpack.c.h.b16 %v44
    %v173 = vunpack.c.l.b16 %v45
    %v174 = vunpack.c.h.b16 %v45
    %v175 = vunpack.c.l.b16 %v46
    %v176 = vunpack.c.h.b16 %v46
    %v177 = vunpack.c.l.b16 %v47
    %v178 = vunpack.c.h.b16 %v47
    %v179 = vunpack.c.l.b16 %v48
    %v180 = vunpack.c.h.b16 %v48
    %v181 = vunpack.c.l.b16 %v49
    %v182 = vunpack.c.h.b16 %v49
    %v183 = vunpack.c.l.b16 %v50
    %v184 = vunpack.c.h.b16 %v50
    %v185 = vunpack.c.l.b16 %v51
    %v186 = vunpack.c.h.b16 %v51
    %v187 = vunpack.c.l.b16 %v52
    %v188 = vunpack.c.h.b16 %v52
    %v189 = vunpack.c.l.b16 %v53
    %v190 = vunpack.c.h.b16 %v53
    %v191 = vunpack.c.l.b16 %v54
    %v192 = vunpack.c.h.b16 %v54
    %v193 = vunpack.c.l.b16 %v55
    %v194 = vunpack.c.h.b16 %v55
    %v195 = vunpack.c.l.b16 %v56
    %v196 = vunpack.c.h.b16 %v56
    %v197 = vunpack.c.l.b16 %v57
    %v198 = vunpack.c.h.b16 %v57
    %v199 = vunpack.c.l.b16 %v58
    %v200 = vunpack.c.h.b16 %v58
    %v201 = vunpack.c.l.b16 %v59
    %v202 = vunpack.c.h.b16 %v59
    %v203 = vunpack.c.l.b16 %v60
    %v204 = vunpack.c.h.b16 %v60
    %v205 = vunpack.c.l.b16 %v61
    %v206 = vunpack.c.h.b16 %v61
    %v207 = vunpack.c.l.b16 %v62
    %v208 = vunpack.c.h.b16 %v62
    %v209 = vunpack.c.l.b16 %v63
    %v210 = vunpack.c.h.b16 %v63
    %v211 = vunpack.c.l.b16 %v64
    %v212 = vunpack.c.h.b16 %v64
    %v213 = vunpack.c.l.b16 %v65
    %v214 = vunpack.c.h.b16 %v65
    %v215 = vunpack.c.l.b16 %v66
    %v216 = vunpack.c.h.b16 %v66
    %v217 = vunpack.c.l.b16 %v67
    %v218 = vunpack.c.h.b16 %v67
    %v219 = vunpack.c.l.b16 %v68
    %v220 = vunpack.c.h.b16 %v68
    %v221 = vunpack.c.l.b16 %v69
    %v222 = vunpack.c.h.b16 %v69
    %v223 = vunpack.c.l.b16 %v70
    %v224 = vunpack.c.h.b16 %v70
    %v225 = vunpack.c.l.b16 %v71
    %v226 = vunpack.c.h.b16 %v71
    %v227 = vunpack.c.l.b16 %v72
    %v228 = vunpack.c.h.b16 %v72
    %v229 = vunpack.c.l.b16 %v73
    %v230 = vunpack.c.h.b16 %v73
    %v231 = vunpack.c.l.b16 %v74
    %v232 = vunpack.c.h.b16 %v74
    %v233 = vunpack.c.l.b16 %v75
    %v234 = vunpack.c.h.b16 %v75
    %v235 = vunpack.c.l.b16 %v76
    %v236 = vunpack.c.h.b16 %v76
    %v237 = vunpack.c.l.b16 %v77
    %v238 = vunpack.c.h.b16 %v77
    %v239 = vunpack.c.l.b16 %v78
    %v240 = vunpack.c.h.b16 %v78
    %v241 = vunpack.c.l.b16 %v79
    %v242 = vunpack.c.h.b16 %v79
    %v243 = vunpack.c.l.b16 %v80
    %v244 = vunpack.c.h.b16 %v80
    %v245 = vunpack.c.l.b16 %v81
    %v246 = vunpack.c.h.b16 %v81
    %v247 = vunpack.c.l.b16 %v82
    %v248 = vunpack.c.h.b16 %v82
    %v249 = vunpack.c.l.b16 %v83
    %v250 = vunpack.c.h.b16 %v83
    %v251 = vunpack.c.l.b16 %v84
    %v252 = vunpack.c.h.b16 %v84
    %v253 = vpack.c.b16 %v159, %v157
    %v254 = vpack.c.b16 %v160, %v158
    %v255 = vpack.c.b16 %v163, %v161
    %v256 = vpack.c.b16 %v164, %v162
    %v257 = vpack.c.b16 %v167, %v165
    %v258 = vpack.c.b16 %v168, %v166
    %v259 = vpack.c.b16 %v171, %v169
    %v260 = vpack.c.b16 %v172, %v170
    %v261 = vpack.c.b16 %v175, %v173
    %v262 = vpack.c.b16 %v176, %v174
    %v263 = vpack.c.b16 %v179, %v177
    %v264 = vpack.c.b16 %v180, %v178
    %v265 = vpack.c.b16 %v183, %v181
    %v266 = vpack.c.b16 %v184, %v182
    %v267 = vpack.c.b16 %v187, %v185
    %v268 = vpack.c.b16 %v188, %v186
    %v269 = vpack.c.b16 %v191, %v189
    %v270 = vpack.c.b16 %v192, %v190
    %v271 = vpack.c.b16 %v195, %v193
    %v272 = vpack.c.b16 %v196, %v194
    %v273 = vpack.c.b16 %v199, %v197
    %v274 = vpack.c.b16 %v200, %v198
    %v275 = vpack.c.b16 %v203, %v201
    %v276 = vpack.c.b16 %v204, %v202
    %v277 = vpack.c.b16 %v207, %v205
    %v278 = vpack.c.b16 %v208, %v206
    %v279 = vpack.c.b16 %v211, %v209
    %v280 = vpack.c.b16 %v212, %v210
    %v281 = vpack.c.b16 %v215, %v213
    %v282 = vpack.c.b16 %v216, %v214
    %v283 = vpack.c.b16 %v219, %v217
    %v284 = vpack.c.b16 %v220, %v218
    %v285 = vpack.c.b16 %v223, %v221
    %v286 = vpack.c.b16 %v224, %v222
    %v287 = vpack.c.b16 %v227, %v225
    %v288 = vpack.c.b16 %v228, %v226
    %v289 = vpack.c.b16 %v231, %v229
    %v290 = vpack.c.b16 %v232, %v230
    %v291 = vpack.c.b16 %v235, %v233
    %v292 = vpack.c.b16 %v236, %v234
    %v293 = vpack.c.b16 %v239, %v237
    %v294 = vpack.c.b16 %v240, %v238
    %v295 = vpack.c.b16 %v243, %v241
    %v296 = vpack.c.b16 %v244, %v242
    %v297 = vpack.c.b16 %v247, %v245
    %v298 = vpack.c.b16 %v248, %v246
    %v299 = vpack.c.b16 %v251, %v249
    %v300 = vpack.c.b16 %v252, %v250
    %v349 = vunpack.c.l.b16 %v85
    %v350 = vunpack.c.l.b16 %v86
    %v351 = vunpack.c.l.b16 %v87
    %v352 = vunpack.c.l.b16 %v88
    %v353 = vunpack.c.l.b16 %v89
    %v354 = vunpack.c.l.b16 %v90
    %v355 = vunpack.c.l.b16 %v91
    %v356 = vunpack.c.l.b16 %v92
    %v357 = vunpack.c.l.b16 %v93
    %v358 = vunpack.c.l.b16 %v94
    %v359 = vunpack.c.l.b16 %v95
    %v360 = vunpack.c.l.b16 %v96
    %v361 = vunpack.c.l.b16 %v97
    %v362 = vunpack.c.l.b16 %v98
    %v363 = vunpack.c.l.b16 %v99
    %v364 = vunpack.c.l.b16 %v100
    %v365 = vunpack.c.l.b16 %v101
    %v366 = vunpack.c.l.b16 %v102
    %v367 = vunpack.c.l.b16 %v103
    %v368 = vunpack.c.l.b16 %v104
    %v369 = vunpack.c.l.b16 %v105
    %v370 = vunpack.c.l.b16 %v106
    %v371 = vunpack.c.l.b16 %v107
    %v372 = vunpack.c.l.b16 %v108
    %v373 = vpack.c.b16 %v350, %v349
    %v374 = vpack.c.b16 %v352, %v351
    %v375 = vpack.c.b16 %v354, %v353
    %v376 = vpack.c.b16 %v356, %v355
    %v377 = vpack.c.b16 %v358, %v357
    %v378 = vpack.c.b16 %v360, %v359
    %v379 = vpack.c.b16 %v362, %v361
    %v380 = vpack.c.b16 %v364, %v363
    %v381 = vpack.c.b16 %v366, %v365
    %v382 = vpack.c.b16 %v368, %v367
    %v383 = vpack.c.b16 %v370, %v369
    %v384 = vpack.c.b16 %v372, %v371
    %vm397 = vcmask 523264
    %v399 = vsel %vm397, %v254, 0
    %v402 = vsel %vm397, %v256, 0
    %v405 = vsel %vm397, %v258, 0
    %v408 = vsel %vm397, %v260, 0
    %v411 = vsel %vm397, %v262, 0
    %v414 = vsel %vm397, %v264, 0
    %v417 = vsel %vm397, %v266, 0
    %v420 = vsel %vm397, %v268, 0
    %v423 = vsel %vm397, %v270, 0
    %v426 = vsel %vm397, %v272, 0
    %v429 = vsel %vm397, %v274, 0
    %v432 = vsel %vm397, %v276, 0
    %v435 = vsel %vm397, %v278, 0
    %v438 = vsel %vm397, %v280, 0
    %v441 = vsel %vm397, %v282, 0
    %v444 = vsel %vm397, %v284, 0
    %v447 = vsel %vm397, %v286, 0
    %v450 = vsel %vm397, %v288, 0
    %v453 = vsel %vm397, %v290, 0
    %v456 = vsel %vm397, %v292, 0
    %v459 = vsel %vm397, %v294, 0
    %v462 = vsel %vm397, %v296, 0
    %v465 = vsel %vm397, %v298, 0
    %v468 = vsel %vm397, %v300, 0
    %470 = vmatprep.subr.bf16.mxu0 0
    %471 = vmatpush1.bf16.msra.mxu0 %v373
    %472 = vmatprep.subr.bf16.mxu0 0
    %473 = vmatpush1.bf16.msra.mxu0 %v374
    %474 = vmatprep.subr.bf16.mxu0 0
    %475 = vmatpush1.bf16.msra.mxu0 %v375
    %476 = vmatprep.subr.bf16.mxu0 0
    %477 = vmatpush1.bf16.msra.mxu0 %v376
    %478 = vmatprep.subr.bf16.mxu0 0
    %479 = vmatpush1.bf16.msra.mxu0 %v377
    %480 = vmatprep.subr.bf16.mxu0 0
    %481 = vmatpush1.bf16.msra.mxu0 %v378
    %482 = vmatprep.subr.bf16.mxu0 0
    %483 = vmatpush1.bf16.msra.mxu0 %v379
    %484 = vmatprep.subr.bf16.mxu0 0
    %485 = vmatpush1.bf16.msra.mxu0 %v380
    %486 = vmatprep.subr.bf16.mxu0 0
    %487 = vmatpush1.bf16.msra.mxu0 %v381
    %488 = vmatprep.subr.bf16.mxu0 0
    %489 = vmatpush1.bf16.msra.mxu0 %v382
    %490 = vmatprep.subr.bf16.mxu0 0
    %491 = vmatpush1.bf16.msra.mxu0 %v383
    %492 = vmatprep.subr.bf16.mxu0 0
    %493 = vmatpush1.bf16.msra.mxu0 %v384
    %494 = vmatprep.subr.bf16.mxu0 0
    %495 = vmatpush1.bf16.msra.mxu0 0
    %496 = vmatprep.subr.bf16.mxu0 0
    %497 = vmatpush1.bf16.msra.mxu0 0
    %498 = vmatprep.subr.bf16.mxu0 0
    %499 = vmatpush1.bf16.msra.mxu0 0
    %500 = vmatprep.subr.bf16.mxu0 0
    %501 = vmatpush1.bf16.msra.mxu0 0
    %502 = vmatprep.mubr.bf16.mxu0 %v399
    %503 = vmatmul.mubr.bf16.gmra.mrb[0].mxu0 %v253
    %v504 = vpop.f32.mrb[0].mxu0
    %v505 = vadd.f32 0.0, %v504
    %v506 = vpop.f32.mrb[0].mxu0
    %v507 = vpop.f32.mrb[0].mxu0
    %v508 = vadd.f32 0.0, %v507
    %v509 = vpop.f32.mrb[0].mxu0
    %510 = vmatprep.mubr.bf16.mxu0 %v402
    %511 = vmatmul.mubr.bf16.gmra.mrb[0].mxu0 %v255
    %v512 = vpop.f32.mrb[0].mxu0
    %v513 = vadd.f32 0.0, %v512
    %v514 = vpop.f32.mrb[0].mxu0
    %v515 = vpop.f32.mrb[0].mxu0
    %v516 = vadd.f32 0.0, %v515
    %v517 = vpop.f32.mrb[0].mxu0
    %518 = vmatprep.mubr.bf16.mxu0 %v405
    %519 = vmatmul.mubr.bf16.gmra.mrb[0].mxu0 %v257
    %v520 = vpop.f32.mrb[0].mxu0
    %v521 = vadd.f32 0.0, %v520
    %v522 = vpop.f32.mrb[0].mxu0
    %v523 = vpop.f32.mrb[0].mxu0
    %v524 = vadd.f32 0.0, %v523
    %v525 = vpop.f32.mrb[0].mxu0
    %526 = vmatprep.mubr.bf16.mxu0 %v408
    %527 = vmatmul.mubr.bf16.gmra.mrb[0].mxu0 %v259
    %v528 = vpop.f32.mrb[0].mxu0
    %v529 = vadd.f32 0.0, %v528
    %v530 = vpop.f32.mrb[0].mxu0
    %v531 = vpop.f32.mrb[0].mxu0
    %v532 = vadd.f32 0.0, %v531
    %v533 = vpop.f32.mrb[0].mxu0
    %534 = vmatprep.mubr.bf16.mxu0 %v411
    %535 = vmatmul.mubr.bf16.gmra.mrb[0].mxu0 %v261
    %v536 = vpop.f32.mrb[0].mxu0
    %v537 = vadd.f32 0.0, %v536
    %v538 = vpop.f32.mrb[0].mxu0
    %v539 = vpop.f32.mrb[0].mxu0
    %v540 = vadd.f32 0.0, %v539
    %v541 = vpop.f32.mrb[0].mxu0
    %542 = vmatprep.mubr.bf16.mxu0 %v414
    %543 = vmatmul.mubr.bf16.gmra.mrb[0].mxu0 %v263
    %v544 = vpop.f32.mrb[0].mxu0
    %v545 = vadd.f32 0.0, %v544
    %v546 = vpop.f32.mrb[0].mxu0
    %v547 = vpop.f32.mrb[0].mxu0
    %v548 = vadd.f32 0.0, %v547
    %v549 = vpop.f32.mrb[0].mxu0
    %550 = vmatprep.mubr.bf16.mxu0 %v417
    %551 = vmatmul.mubr.bf16.gmra.mrb[0].mxu0 %v265
    %v552 = vpop.f32.mrb[0].mxu0
    %v553 = vadd.f32 0.0, %v552
    %v554 = vpop.f32.mrb[0].mxu0
    %v555 = vpop.f32.mrb[0].mxu0
    %v556 = vadd.f32 0.0, %v555
    %v557 = vpop.f32.mrb[0].mxu0
    %558 = vmatprep.mubr.bf16.mxu0 %v420
    %559 = vmatmul.mubr.bf16.gmra.mrb[0].mxu0 %v267
    %v560 = vpop.f32.mrb[0].mxu0
    %v561 = vadd.f32 0.0, %v560
    %v562 = vpop.f32.mrb[0].mxu0
    %v563 = vpop.f32.mrb[0].mxu0
    %v564 = vadd.f32 0.0, %v563
    %v565 = vpop.f32.mrb[0].mxu0
    %566 = vmatprep.mubr.bf16.mxu0 %v423
    %567 = vmatmul.mubr.bf16.gmra.mrb[0].mxu0 %v269
    %v568 = vpop.f32.mrb[0].mxu0
    %v569 = vadd.f32 0.0, %v568
    %v570 = vpop.f32.mrb[0].mxu0
    %v571 = vpop.f32.mrb[0].mxu0
    %v572 = vadd.f32 0.0, %v571
    %v573 = vpop.f32.mrb[0].mxu0
    %574 = vmatprep.mubr.bf16.mxu0 %v426
    %575 = vmatmul.mubr.bf16.gmra.mrb[0].mxu0 %v271
    %v576 = vpop.f32.mrb[0].mxu0
    %v577 = vadd.f32 0.0, %v576
    %v578 = vpop.f32.mrb[0].mxu0
    %v579 = vpop.f32.mrb[0].mxu0
    %v580 = vadd.f32 0.0, %v579
    %v581 = vpop.f32.mrb[0].mxu0
    %582 = vmatprep.mubr.bf16.mxu0 %v429
    %583 = vmatmul.mubr.bf16.gmra.mrb[0].mxu0 %v273
    %v584 = vpop.f32.mrb[0].mxu0
    %v585 = vadd.f32 0.0, %v584
    %v586 = vpop.f32.mrb[0].mxu0
    %v587 = vpop.f32.mrb[0].mxu0
    %v588 = vadd.f32 0.0, %v587
    %v589 = vpop.f32.mrb[0].mxu0
    %590 = vmatprep.mubr.bf16.mxu0 %v432
    %591 = vmatmul.mubr.bf16.gmra.mrb[0].mxu0 %v275
    %v592 = vpop.f32.mrb[0].mxu0
    %v593 = vadd.f32 0.0, %v592
    %v594 = vpop.f32.mrb[0].mxu0
    %v595 = vpop.f32.mrb[0].mxu0
    %v596 = vadd.f32 0.0, %v595
    %v597 = vpop.f32.mrb[0].mxu0
    %598 = vmatprep.mubr.bf16.mxu0 %v435
    %599 = vmatmul.mubr.bf16.gmra.mrb[0].mxu0 %v277
    %v600 = vpop.f32.mrb[0].mxu0
    %v601 = vadd.f32 0.0, %v600
    %v602 = vpop.f32.mrb[0].mxu0
    %v603 = vpop.f32.mrb[0].mxu0
    %v604 = vadd.f32 0.0, %v603
    %v605 = vpop.f32.mrb[0].mxu0
    %606 = vmatprep.mubr.bf16.mxu0 %v438
    %607 = vmatmul.mubr.bf16.gmra.mrb[0].mxu0 %v279
    %v608 = vpop.f32.mrb[0].mxu0
    %v609 = vadd.f32 0.0, %v608
    %v610 = vpop.f32.mrb[0].mxu0
    %v611 = vpop.f32.mrb[0].mxu0
    %v612 = vadd.f32 0.0, %v611
    %v613 = vpop.f32.mrb[0].mxu0
    %614 = vmatprep.mubr.bf16.mxu0 %v441
    %615 = vmatmul.mubr.bf16.gmra.mrb[0].mxu0 %v281
    %v616 = vpop.f32.mrb[0].mxu0
    %v617 = vadd.f32 0.0, %v616
    %v618 = vpop.f32.mrb[0].mxu0
    %v619 = vpop.f32.mrb[0].mxu0
    %v620 = vadd.f32 0.0, %v619
    %v621 = vpop.f32.mrb[0].mxu0
    %622 = vmatprep.mubr.bf16.mxu0 %v444
    %623 = vmatmul.mubr.bf16.gmra.mrb[0].mxu0 %v283
    %v624 = vpop.f32.mrb[0].mxu0
    %v625 = vadd.f32 0.0, %v624
    %v626 = vpop.f32.mrb[0].mxu0
    %v627 = vpop.f32.mrb[0].mxu0
    %v628 = vadd.f32 0.0, %v627
    %v629 = vpop.f32.mrb[0].mxu0
    %630 = vmatprep.mubr.bf16.mxu0 %v447
    %631 = vmatmul.mubr.bf16.gmra.mrb[0].mxu0 %v285
    %v632 = vpop.f32.mrb[0].mxu0
    %v633 = vadd.f32 0.0, %v632
    %v634 = vpop.f32.mrb[0].mxu0
    %v635 = vpop.f32.mrb[0].mxu0
    %v636 = vadd.f32 0.0, %v635
    %v637 = vpop.f32.mrb[0].mxu0
    %638 = vmatprep.mubr.bf16.mxu0 %v450
    %639 = vmatmul.mubr.bf16.gmra.mrb[0].mxu0 %v287
    %v640 = vpop.f32.mrb[0].mxu0
    %v641 = vadd.f32 0.0, %v640
    %v642 = vpop.f32.mrb[0].mxu0
    %v643 = vpop.f32.mrb[0].mxu0
    %v644 = vadd.f32 0.0, %v643
    %v645 = vpop.f32.mrb[0].mxu0
    %646 = vmatprep.mubr.bf16.mxu0 %v453
    %647 = vmatmul.mubr.bf16.gmra.mrb[0].mxu0 %v289
    %v648 = vpop.f32.mrb[0].mxu0
    %v649 = vadd.f32 0.0, %v648
    %v650 = vpop.f32.mrb[0].mxu0
    %v651 = vpop.f32.mrb[0].mxu0
    %v652 = vadd.f32 0.0, %v651
    %v653 = vpop.f32.mrb[0].mxu0
    %654 = vmatprep.mubr.bf16.mxu0 %v456
    %655 = vmatmul.mubr.bf16.gmra.mrb[0].mxu0 %v291
    %v656 = vpop.f32.mrb[0].mxu0
    %v657 = vadd.f32 0.0, %v656
    %v658 = vpop.f32.mrb[0].mxu0
    %v659 = vpop.f32.mrb[0].mxu0
    %v660 = vadd.f32 0.0, %v659
    %v661 = vpop.f32.mrb[0].mxu0
    %662 = vmatprep.mubr.bf16.mxu0 %v459
    %663 = vmatmul.mubr.bf16.gmra.mrb[0].mxu0 %v293
    %v664 = vpop.f32.mrb[0].mxu0
    %v665 = vadd.f32 0.0, %v664
    %v666 = vpop.f32.mrb[0].mxu0
    %v667 = vpop.f32.mrb[0].mxu0
    %v668 = vadd.f32 0.0, %v667
    %v669 = vpop.f32.mrb[0].mxu0
    %670 = vmatprep.mubr.bf16.mxu0 %v462
    %671 = vmatmul.mubr.bf16.gmra.mrb[0].mxu0 %v295
    %v672 = vpop.f32.mrb[0].mxu0
    %v673 = vadd.f32 0.0, %v672
    %v674 = vpop.f32.mrb[0].mxu0
    %v675 = vpop.f32.mrb[0].mxu0
    %v676 = vadd.f32 0.0, %v675
    %v677 = vpop.f32.mrb[0].mxu0
    %678 = vmatprep.mubr.bf16.mxu0 %v465
    %679 = vmatmul.mubr.bf16.gmra.mrb[0].mxu0 %v297
    %v680 = vpop.f32.mrb[0].mxu0
    %v681 = vadd.f32 0.0, %v680
    %v682 = vpop.f32.mrb[0].mxu0
    %v683 = vpop.f32.mrb[0].mxu0
    %v684 = vadd.f32 0.0, %v683
    %v685 = vpop.f32.mrb[0].mxu0
    %686 = vmatprep.mubr.bf16.mxu0 %v468
    %687 = vmatmul.mubr.bf16.gmra.mrb[0].mxu0 %v299
    %v688 = vpop.f32.mrb[0].mxu0
    %v689 = vadd.f32 0.0, %v688
    %v690 = vpop.f32.mrb[0].mxu0
    %v691 = vpop.f32.mrb[0].mxu0
    %v692 = vadd.f32 0.0, %v691
    %v693 = vpop.f32.mrb[0].mxu0
    %694 = vdwg.mxu0
    %v695 = vld [vmem:[%s2] sm:$0xff]
    %v696 = vld [vmem:[%s2 + $0x8] sm:$0xff]
    %v697 = vld [vmem:[%s2 + $0x10] sm:$0xff]
    %v698 = vld [vmem:[%s2 + $0x18] sm:$0xff]
    %v699 = vld [vmem:[%s2 + $0x20] sm:$0xff]
    %v700 = vld [vmem:[%s2 + $0x28] sm:$0xff]
    %v701 = vld [vmem:[%s2 + $0x30] sm:$0xff]
    %v702 = vld [vmem:[%s2 + $0x38] sm:$0xff]
    %v703 = vld [vmem:[%s2 + $0x40] sm:$0xff]
    %v704 = vld [vmem:[%s2 + $0x48] sm:$0xff]
    %v705 = vld [vmem:[%s2 + $0x50] sm:$0xff]
    %v706 = vld [vmem:[%s2 + $0x58] sm:$0xff]
    %v707 = vld [vmem:[%s2 + $0x60] sm:$0xff]
    %v708 = vld [vmem:[%s2 + $0x68] sm:$0xff]
    %v709 = vld [vmem:[%s2 + $0x70] sm:$0xff]
    %v710 = vld [vmem:[%s2 + $0x78] sm:$0xff]
    %v711 = vld [vmem:[%s2 + $0x80] sm:$0xff]
    %v712 = vld [vmem:[%s2 + $0x88] sm:$0xff]
    %v713 = vld [vmem:[%s2 + $0x90] sm:$0xff]
    %v714 = vld [vmem:[%s2 + $0x98] sm:$0xff]
    %v716 = vsel %vm397, %v696, 0
    %v719 = vsel %vm397, %v698, 0
    %v722 = vsel %vm397, %v700, 0
    %v725 = vsel %vm397, %v702, 0
    %v728 = vsel %vm397, %v704, 0
    %v731 = vsel %vm397, %v706, 0
    %v734 = vsel %vm397, %v708, 0
    %v737 = vsel %vm397, %v710, 0
    %v740 = vsel %vm397, %v712, 0
    %v743 = vsel %vm397, %v714, 0
    %745 = vmatprep.subr.mxu0 0.0
    %746 = vmatpush1.msra.mxu0 %v505
    %747 = vmatprep.subr.mxu0 0.0
    %748 = vmatpush1.msra.mxu0 %v508
    %749 = vmatprep.subr.mxu0 0.0
    %750 = vmatpush1.msra.mxu0 %v513
    %751 = vmatprep.subr.mxu0 0.0
    %752 = vmatpush1.msra.mxu0 %v516
    %753 = vmatprep.subr.mxu0 0.0
    %754 = vmatpush1.msra.mxu0 %v521
    %755 = vmatprep.subr.mxu0 0.0
    %756 = vmatpush1.msra.mxu0 %v524
    %757 = vmatprep.subr.mxu0 0.0
    %758 = vmatpush1.msra.mxu0 %v529
    %759 = vmatprep.subr.mxu0 0.0
    %760 = vmatpush1.msra.mxu0 %v532
    %761 = vmatprep.subr.mxu0 0.0
    %762 = vmatpush1.msra.mxu0 %v537
    %763 = vmatprep.subr.mxu0 0.0
    %764 = vmatpush1.msra.mxu0 %v540
    %765 = vmatprep.subr.mxu0 0.0
    %766 = vmatpush1.msra.mxu0 %v545
    %767 = vmatprep.subr.mxu0 0.0
    %768 = vmatpush1.msra.mxu0 %v548
    %769 = vmatprep.subr.mxu0 0.0
    %770 = vmatpush1.msra.mxu0 %v553
    %771 = vmatprep.subr.mxu0 0.0
    %772 = vmatpush1.msra.mxu0 %v556
    %773 = vmatprep.subr.mxu0 0.0
    %774 = vmatpush1.msra.mxu0 %v561
    %775 = vmatprep.subr.mxu0 0.0
    %776 = vmatpush1.msra.mxu0 %v564
    %777 = vmatprep.subr.mxu0 0.0
    %778 = vmatpush1.msra.mxu0 %v569
    %779 = vmatprep.subr.mxu0 0.0
    %780 = vmatpush1.msra.mxu0 %v572
    %781 = vmatprep.subr.mxu0 0.0
    %782 = vmatpush1.msra.mxu0 %v577
    %783 = vmatprep.subr.mxu0 0.0
    %784 = vmatpush1.msra.mxu0 %v580
    %785 = vmatprep.subr.mxu0 0.0
    %786 = vmatpush1.msra.mxu0 %v585
    %787 = vmatprep.subr.mxu0 0.0
    %788 = vmatpush1.msra.mxu0 %v588
    %789 = vmatprep.subr.mxu0 0.0
    %790 = vmatpush1.msra.mxu0 %v593
    %791 = vmatprep.subr.mxu0 0.0
    %792 = vmatpush1.msra.mxu0 %v596
    %793 = vmatprep.subr.mxu0 0.0
    %794 = vmatpush1.msra.mxu0 0.0
    %795 = vmatprep.subr.mxu0 0.0
    %796 = vmatpush1.msra.mxu0 0.0
    %797 = vmatprep.subr.mxu0 0.0
    %798 = vmatpush1.msra.mxu0 0.0
    %799 = vmatprep.subr.mxu0 0.0
    %800 = vmatpush1.msra.mxu0 0.0
    %801 = vmatprep.subr.mxu0 0.0
    %802 = vmatpush1.msra.mxu0 0.0
    %803 = vmatprep.subr.mxu0 0.0
    %804 = vmatpush1.msra.mxu0 0.0
    %805 = vmatprep.subr.mxu0 0.0
    %806 = vmatpush1.msra.mxu0 0.0
    %807 = vmatprep.subr.mxu0 0.0
    %808 = vmatpush1.msra.mxu0 0.0
    %809 = vmatprep.mubr.f32.mxu0 %v716
    %810 = vmatmul.mubr.f32.gmra.mrb[0].mxu0 %v695
    %v811 = vpop.f32.mrb[0].mxu0
    %v812 = vadd.f32 0.0, %v811
    %v813 = vpop.f32.mrb[0].mxu0
    %814 = vmatprep.mubr.f32.mxu0 %v719
    %815 = vmatmul.mubr.f32.gmra.mrb[0].mxu0 %v697
    %v816 = vpop.f32.mrb[0].mxu0
    %v817 = vadd.f32 0.0, %v816
    %v818 = vpop.f32.mrb[0].mxu0
    %819 = vmatprep.mubr.f32.mxu0 %v722
    %820 = vmatmul.mubr.f32.gmra.mrb[0].mxu0 %v699
    %v821 = vpop.f32.mrb[0].mxu0
    %v822 = vadd.f32 0.0, %v821
    %v823 = vpop.f32.mrb[0].mxu0
    %824 = vmatprep.mubr.f32.mxu0 %v725
    %825 = vmatmul.mubr.f32.gmra.mrb[0].mxu0 %v701
    %v826 = vpop.f32.mrb[0].mxu0
    %v827 = vadd.f32 0.0, %v826
    %v828 = vpop.f32.mrb[0].mxu0
    %829 = vmatprep.mubr.f32.mxu0 %v728
    %830 = vmatmul.mubr.f32.gmra.mrb[0].mxu0 %v703
    %v831 = vpop.f32.mrb[0].mxu0
    %v832 = vadd.f32 0.0, %v831
    %v833 = vpop.f32.mrb[0].mxu0
    %834 = vmatprep.mubr.f32.mxu0 %v731
    %835 = vmatmul.mubr.f32.gmra.mrb[0].mxu0 %v705
    %v836 = vpop.f32.mrb[0].mxu0
    %v837 = vadd.f32 0.0, %v836
    %v838 = vpop.f32.mrb[0].mxu0
    %839 = vmatprep.mubr.f32.mxu0 %v734
    %840 = vmatmul.mubr.f32.gmra.mrb[0].mxu0 %v707
    %v841 = vpop.f32.mrb[0].mxu0
    %v842 = vadd.f32 0.0, %v841
    %v843 = vpop.f32.mrb[0].mxu0
    %844 = vmatprep.mubr.f32.mxu0 %v737
    %845 = vmatmul.mubr.f32.gmra.mrb[0].mxu0 %v709
    %v846 = vpop.f32.mrb[0].mxu0
    %v847 = vadd.f32 0.0, %v846
    %v848 = vpop.f32.mrb[0].mxu0
    %849 = vmatprep.mubr.f32.mxu0 %v740
    %850 = vmatmul.mubr.f32.gmra.mrb[0].mxu0 %v711
    %v851 = vpop.f32.mrb[0].mxu0
    %v852 = vadd.f32 0.0, %v851
    %v853 = vpop.f32.mrb[0].mxu0
    %854 = vmatprep.mubr.f32.mxu0 %v743
    %855 = vmatmul.mubr.f32.gmra.mrb[0].mxu0 %v713
    %v856 = vpop.f32.mrb[0].mxu0
    %v857 = vadd.f32 0.0, %v856
    %v858 = vpop.f32.mrb[0].mxu0
    %859 = vdwg.mxu0
    %860 = vmatprep.subr.mxu0 0.0
    %861 = vmatpush1.msra.mxu0 %v601
    %862 = vmatprep.subr.mxu0 0.0
    %863 = vmatpush1.msra.mxu0 %v604
    %864 = vmatprep.subr.mxu0 0.0
    %865 = vmatpush1.msra.mxu0 %v609
    %866 = vmatprep.subr.mxu0 0.0
    %867 = vmatpush1.msra.mxu0 %v612
    %868 = vmatprep.subr.mxu0 0.0
    %869 = vmatpush1.msra.mxu0 %v617
    %870 = vmatprep.subr.mxu0 0.0
    %871 = vmatpush1.msra.mxu0 %v620
    %872 = vmatprep.subr.mxu0 0.0
    %873 = vmatpush1.msra.mxu0 %v625
    %874 = vmatprep.subr.mxu0 0.0
    %875 = vmatpush1.msra.mxu0 %v628
    %876 = vmatprep.subr.mxu0 0.0
    %877 = vmatpush1.msra.mxu0 %v633
    %878 = vmatprep.subr.mxu0 0.0
    %879 = vmatpush1.msra.mxu0 %v636
    %880 = vmatprep.subr.mxu0 0.0
    %881 = vmatpush1.msra.mxu0 %v641
    %882 = vmatprep.subr.mxu0 0.0
    %883 = vmatpush1.msra.mxu0 %v644
    %884 = vmatprep.subr.mxu0 0.0
    %885 = vmatpush1.msra.mxu0 %v649
    %886 = vmatprep.subr.mxu0 0.0
    %887 = vmatpush1.msra.mxu0 %v652
    %888 = vmatprep.subr.mxu0 0.0
    %889 = vmatpush1.msra.mxu0 %v657
    %890 = vmatprep.subr.mxu0 0.0
    %891 = vmatpush1.msra.mxu0 %v660
    %892 = vmatprep.subr.mxu0 0.0
    %893 = vmatpush1.msra.mxu0 %v665
    %894 = vmatprep.subr.mxu0 0.0
    %895 = vmatpush1.msra.mxu0 %v668
    %896 = vmatprep.subr.mxu0 0.0
    %897 = vmatpush1.msra.mxu0 %v673
    %898 = vmatprep.subr.mxu0 0.0
    %899 = vmatpush1.msra.mxu0 %v676
    %900 = vmatprep.subr.mxu0 0.0
    %901 = vmatpush1.msra.mxu0 %v681
    %902 = vmatprep.subr.mxu0 0.0
    %903 = vmatpush1.msra.mxu0 %v684
    %904 = vmatprep.subr.mxu0 0.0
    %905 = vmatpush1.msra.mxu0 %v689
    %906 = vmatprep.subr.mxu0 0.0
    %907 = vmatpush1.msra.mxu0 %v692
    %908 = vmatprep.subr.mxu0 0.0
    %909 = vmatpush1.msra.mxu0 0.0
    %910 = vmatprep.subr.mxu0 0.0
    %911 = vmatpush1.msra.mxu0 0.0
    %912 = vmatprep.subr.mxu0 0.0
    %913 = vmatpush1.msra.mxu0 0.0
    %914 = vmatprep.subr.mxu0 0.0
    %915 = vmatpush1.msra.mxu0 0.0
    %916 = vmatprep.subr.mxu0 0.0
    %917 = vmatpush1.msra.mxu0 0.0
    %918 = vmatprep.subr.mxu0 0.0
    %919 = vmatpush1.msra.mxu0 0.0
    %920 = vmatprep.subr.mxu0 0.0
    %921 = vmatpush1.msra.mxu0 0.0
    %922 = vmatprep.subr.mxu0 0.0
    %923 = vmatpush1.msra.mxu0 0.0
    %924 = vmatprep.mubr.f32.mxu0 %v716
    %925 = vmatmul.mubr.f32.gmra.mrb[0].mxu0 %v695
    %v926 = vpop.f32.mrb[0].mxu0
    %v927 = vadd.f32 0.0, %v926
    %v928 = vpop.f32.mrb[0].mxu0
    %929 = vmatprep.mubr.f32.mxu0 %v719
    %930 = vmatmul.mubr.f32.gmra.mrb[0].mxu0 %v697
    %v931 = vpop.f32.mrb[0].mxu0
    %v932 = vadd.f32 0.0, %v931
    %v933 = vpop.f32.mrb[0].mxu0
    %934 = vmatprep.mubr.f32.mxu0 %v722
    %935 = vmatmul.mubr.f32.gmra.mrb[0].mxu0 %v699
    %v936 = vpop.f32.mrb[0].mxu0
    %v937 = vadd.f32 0.0, %v936
    %v938 = vpop.f32.mrb[0].mxu0
    %939 = vmatprep.mubr.f32.mxu0 %v725
    %940 = vmatmul.mubr.f32.gmra.mrb[0].mxu0 %v701
    %v941 = vpop.f32.mrb[0].mxu0
    %v942 = vadd.f32 0.0, %v941
    %v943 = vpop.f32.mrb[0].mxu0
    %944 = vmatprep.mubr.f32.mxu0 %v728
    %945 = vmatmul.mubr.f32.gmra.mrb[0].mxu0 %v703
    %v946 = vpop.f32.mrb[0].mxu0
    %v947 = vadd.f32 0.0, %v946
    %v948 = vpop.f32.mrb[0].mxu0
    %949 = vmatprep.mubr.f32.mxu0 %v731
    %950 = vmatmul.mubr.f32.gmra.mrb[0].mxu0 %v705
    %v951 = vpop.f32.mrb[0].mxu0
    %v952 = vadd.f32 0.0, %v951
    %v953 = vpop.f32.mrb[0].mxu0
    %954 = vmatprep.mubr.f32.mxu0 %v734
    %955 = vmatmul.mubr.f32.gmra.mrb[0].mxu0 %v707
    %v956 = vpop.f32.mrb[0].mxu0
    %v957 = vadd.f32 0.0, %v956
    %v958 = vpop.f32.mrb[0].mxu0
    %959 = vmatprep.mubr.f32.mxu0 %v737
    %960 = vmatmul.mubr.f32.gmra.mrb[0].mxu0 %v709
    %v961 = vpop.f32.mrb[0].mxu0
    %v962 = vadd.f32 0.0, %v961
    %v963 = vpop.f32.mrb[0].mxu0
    %964 = vmatprep.mubr.f32.mxu0 %v740
    %965 = vmatmul.mubr.f32.gmra.mrb[0].mxu0 %v711
    %v966 = vpop.f32.mrb[0].mxu0
    %v967 = vadd.f32 0.0, %v966
    %v968 = vpop.f32.mrb[0].mxu0
    %969 = vmatprep.mubr.f32.mxu0 %v743
    %970 = vmatmul.mubr.f32.gmra.mrb[0].mxu0 %v713
    %v971 = vpop.f32.mrb[0].mxu0
    %v972 = vadd.f32 0.0, %v971
    %v973 = vpop.f32.mrb[0].mxu0
    %974 = vdwg.mxu0
    %v975 = vld [vmem:[%s3] sm:$0xff]
    %v976 = vld [vmem:[%s3 + $0x8] sm:$0xff]
    %v977 = vld [vmem:[%s3 + $0x10] sm:$0xff]
    %v978 = vld [vmem:[%s3 + $0x18] sm:$0xff]
    %v979 = vld [vmem:[%s3 + $0x20] sm:$0xff]
    %v980 = vld [vmem:[%s3 + $0x28] sm:$0xff]
    %v981 = vld [vmem:[%s3 + $0x30] sm:$0xff]
    %v982 = vld [vmem:[%s3 + $0x38] sm:$0xff]
    %v983 = vld [vmem:[%s3 + $0x40] sm:$0xff]
    %v984 = vld [vmem:[%s3 + $0x48] sm:$0xff]
    %v985 = vmul.f32 %v812, %v975
    %v986 = vmul.f32 %v817, %v976
    %v987 = vmul.f32 %v822, %v977
    %v988 = vmul.f32 %v827, %v978
    %v989 = vmul.f32 %v832, %v979
    %v990 = vmul.f32 %v837, %v980
    %v991 = vmul.f32 %v842, %v981
    %v992 = vmul.f32 %v847, %v982
    %v993 = vmul.f32 %v852, %v983
    %v994 = vmul.f32 %v857, %v984
    %v995 = vmul.f32 %v927, %v975
    %v996 = vmul.f32 %v932, %v976
    %v997 = vmul.f32 %v937, %v977
    %v998 = vmul.f32 %v942, %v978
    %v999 = vmul.f32 %v947, %v979
    %v1000 = vmul.f32 %v952, %v980
    %v1001 = vmul.f32 %v957, %v981
    %v1002 = vmul.f32 %v962, %v982
    %v1003 = vmul.f32 %v967, %v983
    %v1004 = vmul.f32 %v972, %v984
    %v1005 = vadd.f32 %v985, %v987
    %v1006 = vadd.f32 %v986, %v988
    %v1007 = vadd.f32 %v995, %v997
    %v1008 = vadd.f32 %v996, %v998
    %v1009 = vadd.f32 %v1005, %v989
    %v1010 = vadd.f32 %v1006, %v990
    %v1011 = vadd.f32 %v1007, %v999
    %v1012 = vadd.f32 %v1008, %v1000
    %v1013 = vadd.f32 %v1009, %v991
    %v1014 = vadd.f32 %v1010, %v992
    %v1015 = vadd.f32 %v1011, %v1001
    %v1016 = vadd.f32 %v1012, %v1002
    %v1017 = vadd.f32 %v1013, %v993
    %v1018 = vadd.f32 %v1014, %v994
    %v1019 = vadd.f32 %v1015, %v1003
    %v1020 = vadd.f32 %v1016, %v1004
    %v1021 = vcombine.high %v1017, 0.0
    %v1023 = vunpack.c.l.s4 1983009808
    %v1024 = vunpack.c.0.s8 %v1023
    %v1025 = vlaneseq
    %v1026 = vshrl.u32 %v1025, 7
    %v1027 = vsub.s32 %v1024, %v1026
    %v1028 = vrot.slane %v1017, %v1027
    %v1030 = vunpack.c.l.s4 1983009808
    %v1031 = vunpack.c.0.s8 %v1030
    %v1032 = vlaneseq
    %v1033 = vshrl.u32 %v1032, 7
    %v1034 = vsub.s32 %v1031, %v1033
    %v1035 = vrot.slane %v1021, %v1034
    %v1036 = vcombine.high %v1019, 0.0
    %v1038 = vunpack.c.l.s4 1983009808
    %v1039 = vunpack.c.0.s8 %v1038
    %v1040 = vlaneseq
    %v1041 = vshrl.u32 %v1040, 7
    %v1042 = vsub.s32 %v1039, %v1041
    %v1043 = vrot.slane %v1019, %v1042
    %v1045 = vunpack.c.l.s4 1983009808
    %v1046 = vunpack.c.0.s8 %v1045
    %v1047 = vlaneseq
    %v1048 = vshrl.u32 %v1047, 7
    %v1049 = vsub.s32 %v1046, %v1048
    %v1050 = vrot.slane %v1036, %v1049
    %v1051 = vcombine.low %v1028, %v1043
    %v1052 = vcombine.high %v1028, %v1043
    %v1054 = vunpack.c.l.s4 1934713408
    %v1055 = vunpack.c.0.s8 %v1054
    %v1056 = vlaneseq
    %v1057 = vshrl.u32 %v1056, 7
    %v1058 = vsub.s32 %v1055, %v1057
    %v1059 = vrot.slane %v1051, %v1058
    %v1061 = vunpack.c.l.s4 1934713408
    %v1062 = vunpack.c.0.s8 %v1061
    %v1063 = vlaneseq
    %v1064 = vshrl.u32 %v1063, 7
    %v1065 = vsub.s32 %v1062, %v1064
    %v1066 = vrot.slane %v1052, %v1065
    %v1067 = vcombine.low %v1035, %v1050
    %v1068 = vcombine.high %v1035, %v1050
    %v1070 = vunpack.c.l.s4 1934713408
    %v1071 = vunpack.c.0.s8 %v1070
    %v1072 = vlaneseq
    %v1073 = vshrl.u32 %v1072, 7
    %v1074 = vsub.s32 %v1071, %v1073
    %v1075 = vrot.slane %v1067, %v1074
    %v1077 = vunpack.c.l.s4 1934713408
    %v1078 = vunpack.c.0.s8 %v1077
    %v1079 = vlaneseq
    %v1080 = vshrl.u32 %v1079, 7
    %v1081 = vsub.s32 %v1078, %v1080
    %v1082 = vrot.slane %v1068, %v1081
    %v1083 = vcombine.high %v1059, 0.0
    %v1084 = vcombine.high %v1066, 0.0
    %v1085 = vcombine.high %v1075, 0.0
    %v1086 = vcombine.high %v1082, 0.0
    %v1087 = vcombine.high %v1018, 0.0
    %v1089 = vunpack.c.l.s4 1983009808
    %v1090 = vunpack.c.0.s8 %v1089
    %v1091 = vlaneseq
    %v1092 = vshrl.u32 %v1091, 7
    %v1093 = vsub.s32 %v1090, %v1092
    %v1094 = vrot.slane %v1018, %v1093
    %v1096 = vunpack.c.l.s4 1983009808
    %v1097 = vunpack.c.0.s8 %v1096
    %v1098 = vlaneseq
    %v1099 = vshrl.u32 %v1098, 7
    %v1100 = vsub.s32 %v1097, %v1099
    %v1101 = vrot.slane %v1087, %v1100
    %v1102 = vcombine.high %v1020, 0.0
    %v1104 = vunpack.c.l.s4 1983009808
    %v1105 = vunpack.c.0.s8 %v1104
    %v1106 = vlaneseq
    %v1107 = vshrl.u32 %v1106, 7
    %v1108 = vsub.s32 %v1105, %v1107
    %v1109 = vrot.slane %v1020, %v1108
    %v1111 = vunpack.c.l.s4 1983009808
    %v1112 = vunpack.c.0.s8 %v1111
    %v1113 = vlaneseq
    %v1114 = vshrl.u32 %v1113, 7
    %v1115 = vsub.s32 %v1112, %v1114
    %v1116 = vrot.slane %v1102, %v1115
    %v1117 = vcombine.low %v1094, %v1109
    %v1118 = vcombine.high %v1094, %v1109
    %v1120 = vunpack.c.l.s4 1934713408
    %v1121 = vunpack.c.0.s8 %v1120
    %v1122 = vlaneseq
    %v1123 = vshrl.u32 %v1122, 7
    %v1124 = vsub.s32 %v1121, %v1123
    %v1125 = vrot.slane %v1117, %v1124
    %v1127 = vunpack.c.l.s4 1934713408
    %v1128 = vunpack.c.0.s8 %v1127
    %v1129 = vlaneseq
    %v1130 = vshrl.u32 %v1129, 7
    %v1131 = vsub.s32 %v1128, %v1130
    %v1132 = vrot.slane %v1118, %v1131
    %v1133 = vcombine.low %v1101, %v1116
    %v1134 = vcombine.high %v1101, %v1116
    %v1136 = vunpack.c.l.s4 1934713408
    %v1137 = vunpack.c.0.s8 %v1136
    %v1138 = vlaneseq
    %v1139 = vshrl.u32 %v1138, 7
    %v1140 = vsub.s32 %v1137, %v1139
    %v1141 = vrot.slane %v1133, %v1140
    %v1143 = vunpack.c.l.s4 1934713408
    %v1144 = vunpack.c.0.s8 %v1143
    %v1145 = vlaneseq
    %v1146 = vshrl.u32 %v1145, 7
    %v1147 = vsub.s32 %v1144, %v1146
    %v1148 = vrot.slane %v1134, %v1147
    %v1149 = vcombine.high %v1125, 0.0
    %v1150 = vcombine.high %v1132, 0.0
    %v1151 = vcombine.high %v1141, 0.0
    %v1152 = vcombine.high %v1148, 0.0
    %1154 = vrot.lane.b32.xlu0 %v1083, 60
    %v1155 = vpop.permute.xlu0 %1154
    %1158 = vrot.lane.b32.xlu0 %v1066, 120
    %v1159 = vpop.permute.xlu0 %1158
    %1162 = vrot.lane.b32.xlu0 %v1084, 52
    %v1163 = vpop.permute.xlu0 %1162
    %1166 = vrot.lane.b32.xlu0 %v1075, 112
    %v1167 = vpop.permute.xlu0 %1166
    %1170 = vrot.lane.b32.xlu0 %v1085, 44
    %v1171 = vpop.permute.xlu0 %1170
    %1174 = vrot.lane.b32.xlu0 %v1082, 104
    %v1175 = vpop.permute.xlu0 %1174
    %1178 = vrot.lane.b32.xlu0 %v1086, 36
    %v1179 = vpop.permute.xlu0 %1178
    %1182 = vrot.lane.b32.xlu0 %v1125, 96
    %v1183 = vpop.permute.xlu0 %1182
    %1186 = vrot.lane.b32.xlu0 %v1149, 28
    %v1187 = vpop.permute.xlu0 %1186
    %1190 = vrot.lane.b32.xlu0 %v1132, 88
    %v1191 = vpop.permute.xlu0 %1190
    %1194 = vrot.lane.b32.xlu0 %v1150, 20
    %v1195 = vpop.permute.xlu0 %1194
    %1198 = vrot.lane.b32.xlu0 %v1141, 80
    %v1199 = vpop.permute.xlu0 %1198
    %1202 = vrot.lane.b32.xlu0 %v1151, 12
    %v1203 = vpop.permute.xlu0 %1202
    %1206 = vrot.lane.b32.xlu0 %v1148, 72
    %v1207 = vpop.permute.xlu0 %1206
    %1210 = vrot.lane.b32.xlu0 %v1152, 4
    %v1211 = vpop.permute.xlu0 %1210
    %vm1213 = vcmask 490496
    %v1214 = vsel %vm1213, %v1059, %v1155
    %vm1215 = vcmask 982016
    %v1216 = vsel %vm1215, %v1214, %v1159
    %vm1217 = vcmask 424960
    %v1218 = vsel %vm1217, %v1159, %v1163
    %vm1219 = vcmask 916480
    %v1220 = vsel %vm1219, %v1218, %v1167
    %vm1221 = vcmask 359424
    %v1222 = vsel %vm1221, %v1167, %v1171
    %vm1223 = vcmask 850944
    %v1224 = vsel %vm1223, %v1222, %v1175
    %vm1225 = vcmask 293888
    %v1226 = vsel %vm1225, %v1175, %v1179
    %vm1227 = vcmask 785408
    %v1228 = vsel %vm1227, %v1226, %v1183
    %vm1229 = vcmask 228352
    %v1230 = vsel %vm1229, %v1183, %v1187
    %vm1231 = vcmask 719872
    %v1232 = vsel %vm1231, %v1230, %v1191
    %vm1233 = vcmask 162816
    %v1234 = vsel %vm1233, %v1191, %v1195
    %vm1235 = vcmask 654336
    %v1236 = vsel %vm1235, %v1234, %v1199
    %vm1237 = vcmask 97280
    %v1238 = vsel %vm1237, %v1199, %v1203
    %vm1239 = vcmask 588800
    %v1240 = vsel %vm1239, %v1238, %v1207
    %vm1241 = vcmask 31744
    %v1242 = vsel %vm1241, %v1207, %v1211
    %v1243 = vld [vmem:[%s4] sm:$0xff]
    %v1244 = vld [vmem:[%s4 + $0x8] sm:$0xff]
    %v1245 = vld [vmem:[%s4 + $0x10] sm:$0xff]
    %v1246 = vld [vmem:[%s4 + $0x18] sm:$0xff]
    %v1247 = vld [vmem:[%s4 + $0x20] sm:$0xff]
    %v1248 = vld [vmem:[%s4 + $0x28] sm:$0xff]
    %v1249 = vld [vmem:[%s4 + $0x30] sm:$0xff]
    %v1250 = vld [vmem:[%s4 + $0x38] sm:$0xff]
    %v1251 = vld [vmem:[%s4 + $0x40] sm:$0xff]
    %v1252 = vld [vmem:[%s4 + $0x48] sm:$0xff]
    %v1253 = vld [vmem:[%s4 + $0x50] sm:$0xff]
    %v1254 = vld [vmem:[%s4 + $0x58] sm:$0xff]
    %v1255 = vld [vmem:[%s4 + $0x60] sm:$0xff]
    %v1256 = vld [vmem:[%s4 + $0x68] sm:$0xff]
    %v1257 = vld [vmem:[%s4 + $0x70] sm:$0xff]
    %v1258 = vld [vmem:[%s4 + $0x78] sm:$0xff]
    %v1259 = vld [vmem:[%s4 + $0x80] sm:$0xff]
    %v1260 = vld [vmem:[%s4 + $0x88] sm:$0xff]
    %v1261 = vld [vmem:[%s4 + $0x90] sm:$0xff]
    %v1262 = vld [vmem:[%s4 + $0x98] sm:$0xff]
    %v1263 = vld [vmem:[%s4 + $0xa0] sm:$0xff]
    %v1264 = vld [vmem:[%s4 + $0xa8] sm:$0xff]
    %v1265 = vld [vmem:[%s4 + $0xb0] sm:$0xff]
    %v1266 = vld [vmem:[%s4 + $0xb8] sm:$0xff]
    %v1267 = vld [vmem:[%s4 + $0xc0] sm:$0xff]
    %v1268 = vld [vmem:[%s4 + $0xc8] sm:$0xff]
    %v1269 = vld [vmem:[%s4 + $0xd0] sm:$0xff]
    %v1270 = vld [vmem:[%s4 + $0xd8] sm:$0xff]
    %v1271 = vld [vmem:[%s4 + $0xe0] sm:$0xff]
    %v1272 = vld [vmem:[%s4 + $0xe8] sm:$0xff]
    %v1273 = vld [vmem:[%s4 + $0xf0] sm:$0xff]
    %v1274 = vld [vmem:[%s4 + $0xf8] sm:$0xff]
    %v1275 = vld [vmem:[%s4 + $0x100] sm:$0xff]
    %v1276 = vld [vmem:[%s4 + $0x108] sm:$0xff]
    %v1277 = vld [vmem:[%s4 + $0x110] sm:$0xff]
    %v1278 = vld [vmem:[%s4 + $0x118] sm:$0xff]
    %v1279 = vld [vmem:[%s4 + $0x120] sm:$0xff]
    %v1280 = vld [vmem:[%s4 + $0x128] sm:$0xff]
    %v1281 = vld [vmem:[%s4 + $0x130] sm:$0xff]
    %v1282 = vld [vmem:[%s4 + $0x138] sm:$0xff]
    %v1283 = vld [vmem:[%s4 + $0x140] sm:$0xff]
    %v1284 = vld [vmem:[%s4 + $0x148] sm:$0xff]
    %v1285 = vld [vmem:[%s4 + $0x150] sm:$0xff]
    %v1286 = vld [vmem:[%s4 + $0x158] sm:$0xff]
    %v1287 = vld [vmem:[%s4 + $0x160] sm:$0xff]
    %v1288 = vld [vmem:[%s4 + $0x168] sm:$0xff]
    %v1289 = vld [vmem:[%s4 + $0x170] sm:$0xff]
    %v1290 = vld [vmem:[%s4 + $0x178] sm:$0xff]
    %v1291 = vld [vmem:[%s4 + $0x180] sm:$0xff]
    %v1292 = vld [vmem:[%s4 + $0x188] sm:$0xff]
    %v1293 = vld [vmem:[%s4 + $0x190] sm:$0xff]
    %v1294 = vld [vmem:[%s4 + $0x198] sm:$0xff]
    %v1295 = vld [vmem:[%s4 + $0x1a0] sm:$0xff]
    %v1296 = vld [vmem:[%s4 + $0x1a8] sm:$0xff]
    %v1297 = vld [vmem:[%s4 + $0x1b0] sm:$0xff]
    %v1298 = vld [vmem:[%s4 + $0x1b8] sm:$0xff]
    %v1299 = vld [vmem:[%s4 + $0x1c0] sm:$0xff]
    %v1300 = vld [vmem:[%s4 + $0x1c8] sm:$0xff]
    %v1301 = vld [vmem:[%s4 + $0x1d0] sm:$0xff]
    %v1302 = vld [vmem:[%s4 + $0x1d8] sm:$0xff]
    %v1303 = vld [vmem:[%s4 + $0x1e0] sm:$0xff]
    %v1304 = vld [vmem:[%s4 + $0x1e8] sm:$0xff]
    %v1305 = vld [vmem:[%s4 + $0x1f0] sm:$0xff]
    %v1306 = vld [vmem:[%s4 + $0x1f8] sm:$0xff]
    %v1307 = vld [vmem:[%s4 + $0x200] sm:$0xff]
    %v1308 = vld [vmem:[%s4 + $0x208] sm:$0xff]
    %v1309 = vld [vmem:[%s4 + $0x210] sm:$0xff]
    %v1310 = vld [vmem:[%s4 + $0x218] sm:$0xff]
    %v1311 = vld [vmem:[%s4 + $0x220] sm:$0xff]
    %v1312 = vld [vmem:[%s4 + $0x228] sm:$0xff]
    %v1313 = vld [vmem:[%s4 + $0x230] sm:$0xff]
    %v1314 = vld [vmem:[%s4 + $0x238] sm:$0xff]
    %v1315 = vld [vmem:[%s4 + $0x240] sm:$0xff]
    %v1316 = vld [vmem:[%s4 + $0x248] sm:$0xff]
    %v1317 = vld [vmem:[%s4 + $0x250] sm:$0xff]
    %v1318 = vld [vmem:[%s4 + $0x258] sm:$0xff]
    %v1319 = vld [vmem:[%s4 + $0x260] sm:$0xff]
    %v1320 = vld [vmem:[%s4 + $0x268] sm:$0xff]
    %v1321 = vld [vmem:[%s4 + $0x270] sm:$0xff]
    %v1322 = vld [vmem:[%s4 + $0x278] sm:$0xff]
    %v1323 = vld [vmem:[%s4 + $0x280] sm:$0xff]
    %v1324 = vld [vmem:[%s4 + $0x288] sm:$0xff]
    %v1325 = vld [vmem:[%s4 + $0x290] sm:$0xff]
    %v1326 = vld [vmem:[%s4 + $0x298] sm:$0xff]
    %v1327 = vld [vmem:[%s4 + $0x2a0] sm:$0xff]
    %v1328 = vld [vmem:[%s4 + $0x2a8] sm:$0xff]
    %v1329 = vld [vmem:[%s4 + $0x2b0] sm:$0xff]
    %v1330 = vld [vmem:[%s4 + $0x2b8] sm:$0xff]
    %v1331 = vld [vmem:[%s4 + $0x2c0] sm:$0xff]
    %v1332 = vld [vmem:[%s4 + $0x2c8] sm:$0xff]
    %v1333 = vld [vmem:[%s4 + $0x2d0] sm:$0xff]
    %v1334 = vld [vmem:[%s4 + $0x2d8] sm:$0xff]
    %v1335 = vld [vmem:[%s4 + $0x2e0] sm:$0xff]
    %v1336 = vld [vmem:[%s4 + $0x2e8] sm:$0xff]
    %v1337 = vld [vmem:[%s4 + $0x2f0] sm:$0xff]
    %v1338 = vld [vmem:[%s4 + $0x2f8] sm:$0xff]
    %v1339 = vld [vmem:[%s4 + $0x300] sm:$0xff]
    %v1340 = vld [vmem:[%s4 + $0x308] sm:$0xff]
    %v1341 = vld [vmem:[%s4 + $0x310] sm:$0xff]
    %v1342 = vld [vmem:[%s4 + $0x318] sm:$0xff]
    %v1343 = vld [vmem:[%s4 + $0x320] sm:$0xff]
    %v1344 = vld [vmem:[%s4 + $0x328] sm:$0xff]
    %v1345 = vld [vmem:[%s4 + $0x330] sm:$0xff]
    %v1346 = vld [vmem:[%s4 + $0x338] sm:$0xff]
    %v1347 = vld [vmem:[%s4 + $0x340] sm:$0xff]
    %v1348 = vld [vmem:[%s4 + $0x348] sm:$0xff]
    %v1349 = vld [vmem:[%s4 + $0x350] sm:$0xff]
    %v1350 = vld [vmem:[%s4 + $0x358] sm:$0xff]
    %v1351 = vld [vmem:[%s4 + $0x360] sm:$0xff]
    %v1352 = vld [vmem:[%s4 + $0x368] sm:$0xff]
    %v1353 = vld [vmem:[%s4 + $0x370] sm:$0xff]
    %v1354 = vld [vmem:[%s4 + $0x378] sm:$0xff]
    %v1355 = vld [vmem:[%s4 + $0x380] sm:$0xff]
    %v1356 = vld [vmem:[%s4 + $0x388] sm:$0xff]
    %v1357 = vld [vmem:[%s4 + $0x390] sm:$0xff]
    %v1358 = vld [vmem:[%s4 + $0x398] sm:$0xff]
    %v1359 = vld [vmem:[%s4 + $0x3a0] sm:$0xff]
    %v1360 = vld [vmem:[%s4 + $0x3a8] sm:$0xff]
    %v1361 = vld [vmem:[%s4 + $0x3b0] sm:$0xff]
    %v1362 = vld [vmem:[%s4 + $0x3b8] sm:$0xff]
    %v1363 = vld [vmem:[%s4 + $0x3c0] sm:$0xff]
    %v1364 = vld [vmem:[%s4 + $0x3c8] sm:$0xff]
    %v1365 = vld [vmem:[%s4 + $0x3d0] sm:$0xff]
    %v1366 = vld [vmem:[%s4 + $0x3d8] sm:$0xff]
    %v1367 = vld [vmem:[%s4 + $0x3e0] sm:$0xff]
    %v1368 = vld [vmem:[%s4 + $0x3e8] sm:$0xff]
    %v1369 = vld [vmem:[%s4 + $0x3f0] sm:$0xff]
    %v1370 = vld [vmem:[%s4 + $0x3f8] sm:$0xff]
    %v1371 = vld [vmem:[%s4 + $0x400] sm:$0xff]
    %v1372 = vld [vmem:[%s4 + $0x408] sm:$0xff]
    %v1373 = vld [vmem:[%s4 + $0x410] sm:$0xff]
    %v1374 = vld [vmem:[%s4 + $0x418] sm:$0xff]
    %v1375 = vld [vmem:[%s4 + $0x420] sm:$0xff]
    %v1376 = vld [vmem:[%s4 + $0x428] sm:$0xff]
    %v1377 = vld [vmem:[%s4 + $0x430] sm:$0xff]
    %v1378 = vld [vmem:[%s4 + $0x438] sm:$0xff]
    %v1379 = vld [vmem:[%s4 + $0x440] sm:$0xff]
    %v1380 = vld [vmem:[%s4 + $0x448] sm:$0xff]
    %v1381 = vld [vmem:[%s4 + $0x450] sm:$0xff]
    %v1382 = vld [vmem:[%s4 + $0x458] sm:$0xff]
    %v1383 = vld [vmem:[%s4 + $0x460] sm:$0xff]
    %v1384 = vld [vmem:[%s4 + $0x468] sm:$0xff]
    %v1385 = vld [vmem:[%s4 + $0x470] sm:$0xff]
    %v1386 = vld [vmem:[%s4 + $0x478] sm:$0xff]
    %v1387 = vld [vmem:[%s4 + $0x480] sm:$0xff]
    %v1388 = vld [vmem:[%s4 + $0x488] sm:$0xff]
    %v1389 = vld [vmem:[%s4 + $0x490] sm:$0xff]
    %v1390 = vld [vmem:[%s4 + $0x498] sm:$0xff]
    %v1391 = vld [vmem:[%s4 + $0x4a0] sm:$0xff]
    %v1392 = vld [vmem:[%s4 + $0x4a8] sm:$0xff]
    %v1393 = vld [vmem:[%s4 + $0x4b0] sm:$0xff]
    %v1394 = vld [vmem:[%s4 + $0x4b8] sm:$0xff]
    %v1395 = vld [vmem:[%s4 + $0x4c0] sm:$0xff]
    %v1396 = vld [vmem:[%s4 + $0x4c8] sm:$0xff]
    %v1397 = vld [vmem:[%s4 + $0x4d0] sm:$0xff]
    %v1398 = vld [vmem:[%s4 + $0x4d8] sm:$0xff]
    %v1399 = vld [vmem:[%s4 + $0x4e0] sm:$0xff]
    %v1400 = vld [vmem:[%s4 + $0x4e8] sm:$0xff]
    %v1401 = vld [vmem:[%s4 + $0x4f0] sm:$0xff]
    %v1402 = vld [vmem:[%s4 + $0x4f8] sm:$0xff]
    %v1403 = vld [vmem:[%s4 + $0x500] sm:$0xff]
    %v1404 = vld [vmem:[%s4 + $0x508] sm:$0xff]
    %v1405 = vld [vmem:[%s4 + $0x510] sm:$0xff]
    %v1406 = vld [vmem:[%s4 + $0x518] sm:$0xff]
    %v1407 = vld [vmem:[%s4 + $0x520] sm:$0xff]
    %v1408 = vld [vmem:[%s4 + $0x528] sm:$0xff]
    %v1409 = vld [vmem:[%s4 + $0x530] sm:$0xff]
    %v1410 = vld [vmem:[%s4 + $0x538] sm:$0xff]
    %v1411 = vld [vmem:[%s4 + $0x540] sm:$0xff]
    %v1412 = vld [vmem:[%s4 + $0x548] sm:$0xff]
    %v1413 = vld [vmem:[%s4 + $0x550] sm:$0xff]
    %v1414 = vld [vmem:[%s4 + $0x558] sm:$0xff]
    %v1415 = vld [vmem:[%s4 + $0x560] sm:$0xff]
    %v1416 = vld [vmem:[%s4 + $0x568] sm:$0xff]
    %v1417 = vld [vmem:[%s4 + $0x570] sm:$0xff]
    %v1418 = vld [vmem:[%s4 + $0x578] sm:$0xff]
    %v1419 = vld [vmem:[%s4 + $0x580] sm:$0xff]
    %v1420 = vld [vmem:[%s4 + $0x588] sm:$0xff]
    %v1421 = vld [vmem:[%s4 + $0x590] sm:$0xff]
    %v1422 = vld [vmem:[%s4 + $0x598] sm:$0xff]
    %v1423 = vld [vmem:[%s4 + $0x5a0] sm:$0xff]
    %v1424 = vld [vmem:[%s4 + $0x5a8] sm:$0xff]
    %v1425 = vld [vmem:[%s4 + $0x5b0] sm:$0xff]
    %v1426 = vld [vmem:[%s4 + $0x5b8] sm:$0xff]
    %v1427 = vld [vmem:[%s4 + $0x5c0] sm:$0xff]
    %v1428 = vld [vmem:[%s4 + $0x5c8] sm:$0xff]
    %v1429 = vld [vmem:[%s4 + $0x5d0] sm:$0xff]
    %v1430 = vld [vmem:[%s4 + $0x5d8] sm:$0xff]
    %v1431 = vld [vmem:[%s4 + $0x5e0] sm:$0xff]
    %v1432 = vld [vmem:[%s4 + $0x5e8] sm:$0xff]
    %v1433 = vld [vmem:[%s4 + $0x5f0] sm:$0xff]
    %v1434 = vld [vmem:[%s4 + $0x5f8] sm:$0xff]
    %v1435 = vld [vmem:[%s4 + $0x600] sm:$0xff]
    %v1436 = vld [vmem:[%s4 + $0x608] sm:$0xff]
    %v1437 = vld [vmem:[%s4 + $0x610] sm:$0xff]
    %v1438 = vld [vmem:[%s4 + $0x618] sm:$0xff]
    %v1439 = vld [vmem:[%s4 + $0x620] sm:$0xff]
    %v1440 = vld [vmem:[%s4 + $0x628] sm:$0xff]
    %v1441 = vld [vmem:[%s4 + $0x630] sm:$0xff]
    %v1442 = vld [vmem:[%s4 + $0x638] sm:$0xff]
    %v1443 = vld [vmem:[%s4 + $0x640] sm:$0xff]
    %v1444 = vld [vmem:[%s4 + $0x648] sm:$0xff]
    %v1445 = vld [vmem:[%s4 + $0x650] sm:$0xff]
    %v1446 = vld [vmem:[%s4 + $0x658] sm:$0xff]
    %v1447 = vld [vmem:[%s4 + $0x660] sm:$0xff]
    %v1448 = vld [vmem:[%s4 + $0x668] sm:$0xff]
    %v1449 = vld [vmem:[%s4 + $0x670] sm:$0xff]
    %v1450 = vld [vmem:[%s4 + $0x678] sm:$0xff]
    %v1451 = vld [vmem:[%s4 + $0x680] sm:$0xff]
    %v1452 = vld [vmem:[%s4 + $0x688] sm:$0xff]
    %v1453 = vld [vmem:[%s4 + $0x690] sm:$0xff]
    %v1454 = vld [vmem:[%s4 + $0x698] sm:$0xff]
    %v1455 = vld [vmem:[%s4 + $0x6a0] sm:$0xff]
    %v1456 = vld [vmem:[%s4 + $0x6a8] sm:$0xff]
    %v1457 = vld [vmem:[%s4 + $0x6b0] sm:$0xff]
    %v1458 = vld [vmem:[%s4 + $0x6b8] sm:$0xff]
    %v1459 = vld [vmem:[%s4 + $0x6c0] sm:$0xff]
    %v1460 = vld [vmem:[%s4 + $0x6c8] sm:$0xff]
    %v1461 = vld [vmem:[%s4 + $0x6d0] sm:$0xff]
    %v1462 = vld [vmem:[%s4 + $0x6d8] sm:$0xff]
    %v1463 = vld [vmem:[%s4 + $0x6e0] sm:$0xff]
    %v1464 = vld [vmem:[%s4 + $0x6e8] sm:$0xff]
    %v1465 = vld [vmem:[%s4 + $0x6f0] sm:$0xff]
    %v1466 = vld [vmem:[%s4 + $0x6f8] sm:$0xff]
    %v1467 = vld [vmem:[%s4 + $0x700] sm:$0xff]
    %v1468 = vld [vmem:[%s4 + $0x708] sm:$0xff]
    %v1469 = vld [vmem:[%s4 + $0x710] sm:$0xff]
    %v1470 = vld [vmem:[%s4 + $0x718] sm:$0xff]
    %v1471 = vld [vmem:[%s4 + $0x720] sm:$0xff]
    %v1472 = vld [vmem:[%s4 + $0x728] sm:$0xff]
    %v1473 = vld [vmem:[%s4 + $0x730] sm:$0xff]
    %v1474 = vld [vmem:[%s4 + $0x738] sm:$0xff]
    %v1475 = vld [vmem:[%s4 + $0x740] sm:$0xff]
    %v1476 = vld [vmem:[%s4 + $0x748] sm:$0xff]
    %v1477 = vld [vmem:[%s4 + $0x750] sm:$0xff]
    %v1478 = vld [vmem:[%s4 + $0x758] sm:$0xff]
    %v1479 = vld [vmem:[%s4 + $0x760] sm:$0xff]
    %v1480 = vld [vmem:[%s4 + $0x768] sm:$0xff]
    %v1481 = vld [vmem:[%s4 + $0x770] sm:$0xff]
    %v1482 = vld [vmem:[%s4 + $0x778] sm:$0xff]
    %v1483 = vld [vmem:[%s5] sm:$0x3]
    %v1485 = vlaneseq
    %v1486 = vshrl.u32 %v1485, 7
    %v1487 = vsub.s32 0, %v1486
    %v1488 = vrot.slane %v1483, %v1487
    %v1489 = vlaneseq
    %v1490 = vshrl.u32 %v1489, 7
    %v1491 = vsub.s32 1, %v1490
    %v1492 = vrot.slane %v1483, %v1491
    %v1496 = vsel %vm397, %v1242, 0
    %1498 = vmatprep.subr.mxu0 %v1244
    %1499 = vmatpush1.msra.mxu0 %v1243
    %1500 = vmatprep.subr.mxu0 %v1246
    %1501 = vmatpush1.msra.mxu0 %v1245
    %1502 = vmatprep.subr.mxu0 %v1248
    %1503 = vmatpush1.msra.mxu0 %v1247
    %1504 = vmatprep.subr.mxu0 %v1250
    %1505 = vmatpush1.msra.mxu0 %v1249
    %1506 = vmatprep.subr.mxu0 %v1252
    %1507 = vmatpush1.msra.mxu0 %v1251
    %1508 = vmatprep.subr.mxu0 %v1254
    %1509 = vmatpush1.msra.mxu0 %v1253
    %1510 = vmatprep.subr.mxu0 %v1256
    %1511 = vmatpush1.msra.mxu0 %v1255
    %1512 = vmatprep.subr.mxu0 %v1258
    %1513 = vmatpush1.msra.mxu0 %v1257
    %1514 = vmatprep.subr.mxu0 %v1260
    %1515 = vmatpush1.msra.mxu0 %v1259
    %1516 = vmatprep.subr.mxu0 %v1262
    %1517 = vmatpush1.msra.mxu0 %v1261
    %1518 = vmatprep.subr.mxu0 %v1264
    %1519 = vmatpush1.msra.mxu0 %v1263
    %1520 = vmatprep.subr.mxu0 %v1266
    %1521 = vmatpush1.msra.mxu0 %v1265
    %1522 = vmatprep.subr.mxu0 %v1268
    %1523 = vmatpush1.msra.mxu0 %v1267
    %1524 = vmatprep.subr.mxu0 %v1270
    %1525 = vmatpush1.msra.mxu0 %v1269
    %1526 = vmatprep.subr.mxu0 %v1272
    %1527 = vmatpush1.msra.mxu0 %v1271
    %1528 = vmatprep.subr.mxu0 %v1274
    %1529 = vmatpush1.msra.mxu0 %v1273
    %1530 = vmatprep.subr.mxu0 %v1276
    %1531 = vmatpush1.msra.mxu0 %v1275
    %1532 = vmatprep.subr.mxu0 %v1278
    %1533 = vmatpush1.msra.mxu0 %v1277
    %1534 = vmatprep.subr.mxu0 %v1280
    %1535 = vmatpush1.msra.mxu0 %v1279
    %1536 = vmatprep.subr.mxu0 %v1282
    %1537 = vmatpush1.msra.mxu0 %v1281
    %1538 = vmatprep.subr.mxu0 %v1284
    %1539 = vmatpush1.msra.mxu0 %v1283
    %1540 = vmatprep.subr.mxu0 %v1286
    %1541 = vmatpush1.msra.mxu0 %v1285
    %1542 = vmatprep.subr.mxu0 %v1288
    %1543 = vmatpush1.msra.mxu0 %v1287
    %1544 = vmatprep.subr.mxu0 %v1290
    %1545 = vmatpush1.msra.mxu0 %v1289
    %1546 = vmatprep.subr.mxu0 %v1292
    %1547 = vmatpush1.msra.mxu0 %v1291
    %1548 = vmatprep.subr.mxu0 %v1294
    %1549 = vmatpush1.msra.mxu0 %v1293
    %1550 = vmatprep.subr.mxu0 %v1296
    %1551 = vmatpush1.msra.mxu0 %v1295
    %1552 = vmatprep.subr.mxu0 %v1298
    %1553 = vmatpush1.msra.mxu0 %v1297
    %1554 = vmatprep.subr.mxu0 %v1300
    %1555 = vmatpush1.msra.mxu0 %v1299
    %1556 = vmatprep.subr.mxu0 %v1302
    %1557 = vmatpush1.msra.mxu0 %v1301
    %1558 = vmatprep.subr.mxu0 %v1304
    %1559 = vmatpush1.msra.mxu0 %v1303
    %1560 = vmatprep.subr.mxu0 %v1306
    %1561 = vmatpush1.msra.mxu0 %v1305
    %1562 = vmatprep.mubr.f32.mxu0 %v1220
    %1563 = vmatmul.mubr.f32.gmra.mrb[0].mxu0 %v1216
    %v1564 = vpop.f32.mrb[0].mxu0
    %v1565 = vadd.f32 %v1488, %v1564
    %v1566 = vpop.f32.mrb[0].mxu0
    %v1567 = vadd.f32 %v1492, %v1566
    %1568 = vdwg.mxu0
    %1569 = vmatprep.subr.mxu0 %v1308
    %1570 = vmatpush1.msra.mxu0 %v1307
    %1571 = vmatprep.subr.mxu0 %v1310
    %1572 = vmatpush1.msra.mxu0 %v1309
    %1573 = vmatprep.subr.mxu0 %v1312
    %1574 = vmatpush1.msra.mxu0 %v1311
    %1575 = vmatprep.subr.mxu0 %v1314
    %1576 = vmatpush1.msra.mxu0 %v1313
    %1577 = vmatprep.subr.mxu0 %v1316
    %1578 = vmatpush1.msra.mxu0 %v1315
    %1579 = vmatprep.subr.mxu0 %v1318
    %1580 = vmatpush1.msra.mxu0 %v1317
    %1581 = vmatprep.subr.mxu0 %v1320
    %1582 = vmatpush1.msra.mxu0 %v1319
    %1583 = vmatprep.subr.mxu0 %v1322
    %1584 = vmatpush1.msra.mxu0 %v1321
    %1585 = vmatprep.subr.mxu0 %v1324
    %1586 = vmatpush1.msra.mxu0 %v1323
    %1587 = vmatprep.subr.mxu0 %v1326
    %1588 = vmatpush1.msra.mxu0 %v1325
    %1589 = vmatprep.subr.mxu0 %v1328
    %1590 = vmatpush1.msra.mxu0 %v1327
    %1591 = vmatprep.subr.mxu0 %v1330
    %1592 = vmatpush1.msra.mxu0 %v1329
    %1593 = vmatprep.subr.mxu0 %v1332
    %1594 = vmatpush1.msra.mxu0 %v1331
    %1595 = vmatprep.subr.mxu0 %v1334
    %1596 = vmatpush1.msra.mxu0 %v1333
    %1597 = vmatprep.subr.mxu0 %v1336
    %1598 = vmatpush1.msra.mxu0 %v1335
    %1599 = vmatprep.subr.mxu0 %v1338
    %1600 = vmatpush1.msra.mxu0 %v1337
    %1601 = vmatprep.subr.mxu0 %v1340
    %1602 = vmatpush1.msra.mxu0 %v1339
    %1603 = vmatprep.subr.mxu0 %v1342
    %1604 = vmatpush1.msra.mxu0 %v1341
    %1605 = vmatprep.subr.mxu0 %v1344
    %1606 = vmatpush1.msra.mxu0 %v1343
    %1607 = vmatprep.subr.mxu0 %v1346
    %1608 = vmatpush1.msra.mxu0 %v1345
    %1609 = vmatprep.subr.mxu0 %v1348
    %1610 = vmatpush1.msra.mxu0 %v1347
    %1611 = vmatprep.subr.mxu0 %v1350
    %1612 = vmatpush1.msra.mxu0 %v1349
    %1613 = vmatprep.subr.mxu0 %v1352
    %1614 = vmatpush1.msra.mxu0 %v1351
    %1615 = vmatprep.subr.mxu0 %v1354
    %1616 = vmatpush1.msra.mxu0 %v1353
    %1617 = vmatprep.subr.mxu0 %v1356
    %1618 = vmatpush1.msra.mxu0 %v1355
    %1619 = vmatprep.subr.mxu0 %v1358
    %1620 = vmatpush1.msra.mxu0 %v1357
    %1621 = vmatprep.subr.mxu0 %v1360
    %1622 = vmatpush1.msra.mxu0 %v1359
    %1623 = vmatprep.subr.mxu0 %v1362
    %1624 = vmatpush1.msra.mxu0 %v1361
    %1625 = vmatprep.subr.mxu0 %v1364
    %1626 = vmatpush1.msra.mxu0 %v1363
    %1627 = vmatprep.subr.mxu0 %v1366
    %1628 = vmatpush1.msra.mxu0 %v1365
    %1629 = vmatprep.subr.mxu0 %v1368
    %1630 = vmatpush1.msra.mxu0 %v1367
    %1631 = vmatprep.subr.mxu0 %v1370
    %1632 = vmatpush1.msra.mxu0 %v1369
    %1633 = vmatprep.mubr.f32.mxu0 %v1228
    %1634 = vmatmul.mubr.f32.gmra.mrb[0].mxu0 %v1224
    %v1635 = vpop.f32.mrb[0].mxu0
    %v1636 = vadd.f32 %v1565, %v1635
    %v1637 = vpop.f32.mrb[0].mxu0
    %v1638 = vadd.f32 %v1567, %v1637
    %1639 = vdwg.mxu0
    %1640 = vmatprep.subr.mxu0 %v1372
    %1641 = vmatpush1.msra.mxu0 %v1371
    %1642 = vmatprep.subr.mxu0 %v1374
    %1643 = vmatpush1.msra.mxu0 %v1373
    %1644 = vmatprep.subr.mxu0 %v1376
    %1645 = vmatpush1.msra.mxu0 %v1375
    %1646 = vmatprep.subr.mxu0 %v1378
    %1647 = vmatpush1.msra.mxu0 %v1377
    %1648 = vmatprep.subr.mxu0 %v1380
    %1649 = vmatpush1.msra.mxu0 %v1379
    %1650 = vmatprep.subr.mxu0 %v1382
    %1651 = vmatpush1.msra.mxu0 %v1381
    %1652 = vmatprep.subr.mxu0 %v1384
    %1653 = vmatpush1.msra.mxu0 %v1383
    %1654 = vmatprep.subr.mxu0 %v1386
    %1655 = vmatpush1.msra.mxu0 %v1385
    %1656 = vmatprep.subr.mxu0 %v1388
    %1657 = vmatpush1.msra.mxu0 %v1387
    %1658 = vmatprep.subr.mxu0 %v1390
    %1659 = vmatpush1.msra.mxu0 %v1389
    %1660 = vmatprep.subr.mxu0 %v1392
    %1661 = vmatpush1.msra.mxu0 %v1391
    %1662 = vmatprep.subr.mxu0 %v1394
    %1663 = vmatpush1.msra.mxu0 %v1393
    %1664 = vmatprep.subr.mxu0 %v1396
    %1665 = vmatpush1.msra.mxu0 %v1395
    %1666 = vmatprep.subr.mxu0 %v1398
    %1667 = vmatpush1.msra.mxu0 %v1397
    %1668 = vmatprep.subr.mxu0 %v1400
    %1669 = vmatpush1.msra.mxu0 %v1399
    %1670 = vmatprep.subr.mxu0 %v1402
    %1671 = vmatpush1.msra.mxu0 %v1401
    %1672 = vmatprep.subr.mxu0 %v1404
    %1673 = vmatpush1.msra.mxu0 %v1403
    %1674 = vmatprep.subr.mxu0 %v1406
    %1675 = vmatpush1.msra.mxu0 %v1405
    %1676 = vmatprep.subr.mxu0 %v1408
    %1677 = vmatpush1.msra.mxu0 %v1407
    %1678 = vmatprep.subr.mxu0 %v1410
    %1679 = vmatpush1.msra.mxu0 %v1409
    %1680 = vmatprep.subr.mxu0 %v1412
    %1681 = vmatpush1.msra.mxu0 %v1411
    %1682 = vmatprep.subr.mxu0 %v1414
    %1683 = vmatpush1.msra.mxu0 %v1413
    %1684 = vmatprep.subr.mxu0 %v1416
    %1685 = vmatpush1.msra.mxu0 %v1415
    %1686 = vmatprep.subr.mxu0 %v1418
    %1687 = vmatpush1.msra.mxu0 %v1417
    %1688 = vmatprep.subr.mxu0 %v1420
    %1689 = vmatpush1.msra.mxu0 %v1419
    %1690 = vmatprep.subr.mxu0 %v1422
    %1691 = vmatpush1.msra.mxu0 %v1421
    %1692 = vmatprep.subr.mxu0 %v1424
    %1693 = vmatpush1.msra.mxu0 %v1423
    %1694 = vmatprep.subr.mxu0 %v1426
    %1695 = vmatpush1.msra.mxu0 %v1425
    %1696 = vmatprep.subr.mxu0 %v1428
    %1697 = vmatpush1.msra.mxu0 %v1427
    %1698 = vmatprep.subr.mxu0 %v1430
    %1699 = vmatpush1.msra.mxu0 %v1429
    %1700 = vmatprep.subr.mxu0 %v1432
    %1701 = vmatpush1.msra.mxu0 %v1431
    %1702 = vmatprep.subr.mxu0 %v1434
    %1703 = vmatpush1.msra.mxu0 %v1433
    %1704 = vmatprep.mubr.f32.mxu0 %v1236
    %1705 = vmatmul.mubr.f32.gmra.mrb[0].mxu0 %v1232
    %v1706 = vpop.f32.mrb[0].mxu0
    %v1707 = vadd.f32 %v1636, %v1706
    %v1708 = vpop.f32.mrb[0].mxu0
    %v1709 = vadd.f32 %v1638, %v1708
    %1710 = vdwg.mxu0
    %1711 = vmatprep.subr.mxu0 %v1436
    %1712 = vmatpush1.msra.mxu0 %v1435
    %1713 = vmatprep.subr.mxu0 %v1438
    %1714 = vmatpush1.msra.mxu0 %v1437
    %1715 = vmatprep.subr.mxu0 %v1440
    %1716 = vmatpush1.msra.mxu0 %v1439
    %1717 = vmatprep.subr.mxu0 %v1442
    %1718 = vmatpush1.msra.mxu0 %v1441
    %1719 = vmatprep.subr.mxu0 %v1444
    %1720 = vmatpush1.msra.mxu0 %v1443
    %1721 = vmatprep.subr.mxu0 %v1446
    %1722 = vmatpush1.msra.mxu0 %v1445
    %1723 = vmatprep.subr.mxu0 %v1448
    %1724 = vmatpush1.msra.mxu0 %v1447
    %1725 = vmatprep.subr.mxu0 %v1450
    %1726 = vmatpush1.msra.mxu0 %v1449
    %1727 = vmatprep.subr.mxu0 %v1452
    %1728 = vmatpush1.msra.mxu0 %v1451
    %1729 = vmatprep.subr.mxu0 %v1454
    %1730 = vmatpush1.msra.mxu0 %v1453
    %1731 = vmatprep.subr.mxu0 %v1456
    %1732 = vmatpush1.msra.mxu0 %v1455
    %1733 = vmatprep.subr.mxu0 %v1458
    %1734 = vmatpush1.msra.mxu0 %v1457
    %1735 = vmatprep.subr.mxu0 %v1460
    %1736 = vmatpush1.msra.mxu0 %v1459
    %1737 = vmatprep.subr.mxu0 %v1462
    %1738 = vmatpush1.msra.mxu0 %v1461
    %1739 = vmatprep.subr.mxu0 %v1464
    %1740 = vmatpush1.msra.mxu0 %v1463
    %1741 = vmatprep.subr.mxu0 %v1466
    %1742 = vmatpush1.msra.mxu0 %v1465
    %1743 = vmatprep.subr.mxu0 %v1468
    %1744 = vmatpush1.msra.mxu0 %v1467
    %1745 = vmatprep.subr.mxu0 %v1470
    %1746 = vmatpush1.msra.mxu0 %v1469
    %1747 = vmatprep.subr.mxu0 %v1472
    %1748 = vmatpush1.msra.mxu0 %v1471
    %1749 = vmatprep.subr.mxu0 %v1474
    %1750 = vmatpush1.msra.mxu0 %v1473
    %1751 = vmatprep.subr.mxu0 %v1476
    %1752 = vmatpush1.msra.mxu0 %v1475
    %1753 = vmatprep.subr.mxu0 %v1478
    %1754 = vmatpush1.msra.mxu0 %v1477
    %1755 = vmatprep.subr.mxu0 %v1480
    %1756 = vmatpush1.msra.mxu0 %v1479
    %1757 = vmatprep.subr.mxu0 %v1482
    %1758 = vmatpush1.msra.mxu0 %v1481
    %1759 = vmatprep.subr.mxu0 0.0
    %1760 = vmatpush1.msra.mxu0 0.0
    %1761 = vmatprep.subr.mxu0 0.0
    %1762 = vmatpush1.msra.mxu0 0.0
    %1763 = vmatprep.subr.mxu0 0.0
    %1764 = vmatpush1.msra.mxu0 0.0
    %1765 = vmatprep.subr.mxu0 0.0
    %1766 = vmatpush1.msra.mxu0 0.0
    %1767 = vmatprep.subr.mxu0 0.0
    %1768 = vmatpush1.msra.mxu0 0.0
    %1769 = vmatprep.subr.mxu0 0.0
    %1770 = vmatpush1.msra.mxu0 0.0
    %1771 = vmatprep.subr.mxu0 0.0
    %1772 = vmatpush1.msra.mxu0 0.0
    %1773 = vmatprep.subr.mxu0 0.0
    %1774 = vmatpush1.msra.mxu0 0.0
    %1775 = vmatprep.mubr.f32.mxu0 %v1496
    %1776 = vmatmul.mubr.f32.gmra.mrb[0].mxu0 %v1240
    %v1777 = vpop.f32.mrb[0].mxu0
    %v1778 = vadd.f32 %v1707, %v1777
    %v1779 = vpop.f32.mrb[0].mxu0
    %v1780 = vadd.f32 %v1709, %v1779
    %1781 = vdwg.mxu0
    %v1782 = vmax.f32 %v1778, 0.0
    %v1783 = vmax.f32 %v1780, 0.0
    %v1784 = vld [vmem:[%s6] sm:$0xff]
    %v1785 = vld [vmem:[%s6 + $0x8] sm:$0xff]
    %v1786 = vld [vmem:[%s6 + $0x10] sm:$0xff]
    %v1787 = vld [vmem:[%s6 + $0x18] sm:$0xff]
    %v1788 = vld [vmem:[%s6 + $0x20] sm:$0xff]
    %v1789 = vld [vmem:[%s6 + $0x28] sm:$0xff]
    %v1790 = vld [vmem:[%s6 + $0x30] sm:$0xff]
    %v1791 = vld [vmem:[%s6 + $0x38] sm:$0xff]
    %v1792 = vld [vmem:[%s6 + $0x40] sm:$0xff]
    %v1793 = vld [vmem:[%s6 + $0x48] sm:$0xff]
    %v1794 = vld [vmem:[%s6 + $0x50] sm:$0xff]
    %v1795 = vld [vmem:[%s6 + $0x58] sm:$0xff]
    %v1796 = vld [vmem:[%s6 + $0x60] sm:$0xff]
    %v1797 = vld [vmem:[%s6 + $0x68] sm:$0xff]
    %v1798 = vld [vmem:[%s6 + $0x70] sm:$0xff]
    %v1799 = vld [vmem:[%s6 + $0x78] sm:$0xff]
    %v1800 = vld [vmem:[%s6 + $0x80] sm:$0xff]
    %v1801 = vld [vmem:[%s6 + $0x88] sm:$0xff]
    %v1802 = vld [vmem:[%s6 + $0x90] sm:$0x3f]
    %v1803 = vld [vmem:[%s7] sm:$0x1]
    %v1805 = vlaneseq
    %v1806 = vshrl.u32 %v1805, 7
    %v1807 = vsub.s32 0, %v1806
    %v1808 = vrot.slane %v1803, %v1807
    %vm1810 = vcmask 179200
    %v1812 = vsel %vm1810, %v1783, 0
    %vm1814 = vcmask 1045504
    %v1816 = vsel %vm1814, %v1802, 0
    %1818 = vmatprep.subr.mxu0 0.0
    %1819 = vmatpush1.msra.mxu0 %v1784
    %1820 = vmatprep.subr.mxu0 0.0
    %1821 = vmatpush1.msra.mxu0 %v1785
    %1822 = vmatprep.subr.mxu0 0.0
    %1823 = vmatpush1.msra.mxu0 %v1786
    %1824 = vmatprep.subr.mxu0 0.0
    %1825 = vmatpush1.msra.mxu0 %v1787
    %1826 = vmatprep.subr.mxu0 0.0
    %1827 = vmatpush1.msra.mxu0 %v1788
    %1828 = vmatprep.subr.mxu0 0.0
    %1829 = vmatpush1.msra.mxu0 %v1789
    %1830 = vmatprep.subr.mxu0 0.0
    %1831 = vmatpush1.msra.mxu0 %v1790
    %1832 = vmatprep.subr.mxu0 0.0
    %1833 = vmatpush1.msra.mxu0 %v1791
    %1834 = vmatprep.subr.mxu0 0.0
    %1835 = vmatpush1.msra.mxu0 %v1792
    %1836 = vmatprep.subr.mxu0 0.0
    %1837 = vmatpush1.msra.mxu0 %v1793
    %1838 = vmatprep.subr.mxu0 0.0
    %1839 = vmatpush1.msra.mxu0 %v1794
    %1840 = vmatprep.subr.mxu0 0.0
    %1841 = vmatpush1.msra.mxu0 %v1795
    %1842 = vmatprep.subr.mxu0 0.0
    %1843 = vmatpush1.msra.mxu0 %v1796
    %1844 = vmatprep.subr.mxu0 0.0
    %1845 = vmatpush1.msra.mxu0 %v1797
    %1846 = vmatprep.subr.mxu0 0.0
    %1847 = vmatpush1.msra.mxu0 %v1798
    %1848 = vmatprep.subr.mxu0 0.0
    %1849 = vmatpush1.msra.mxu0 %v1799
    %1850 = vmatprep.subr.mxu0 0.0
    %1851 = vmatpush1.msra.mxu0 %v1800
    %1852 = vmatprep.subr.mxu0 0.0
    %1853 = vmatpush1.msra.mxu0 %v1801
    %1854 = vmatprep.subr.mxu0 0.0
    %1855 = vmatpush1.msra.mxu0 %v1816
    %1856 = vmatprep.subr.mxu0 0.0
    %1857 = vmatpush1.msra.mxu0 0.0
    %1858 = vmatprep.subr.mxu0 0.0
    %1859 = vmatpush1.msra.mxu0 0.0
    %1860 = vmatprep.subr.mxu0 0.0
    %1861 = vmatpush1.msra.mxu0 0.0
    %1862 = vmatprep.subr.mxu0 0.0
    %1863 = vmatpush1.msra.mxu0 0.0
    %1864 = vmatprep.subr.mxu0 0.0
    %1865 = vmatpush1.msra.mxu0 0.0
    %1866 = vmatprep.subr.mxu0 0.0
    %1867 = vmatpush1.msra.mxu0 0.0
    %1868 = vmatprep.subr.mxu0 0.0
    %1869 = vmatpush1.msra.mxu0 0.0
    %1870 = vmatprep.subr.mxu0 0.0
    %1871 = vmatpush1.msra.mxu0 0.0
    %1872 = vmatprep.subr.mxu0 0.0
    %1873 = vmatpush1.msra.mxu0 0.0
    %1874 = vmatprep.subr.mxu0 0.0
    %1875 = vmatpush1.msra.mxu0 0.0
    %1876 = vmatprep.subr.mxu0 0.0
    %1877 = vmatpush1.msra.mxu0 0.0
    %1878 = vmatprep.subr.mxu0 0.0
    %1879 = vmatpush1.msra.mxu0 0.0
    %1880 = vmatprep.subr.mxu0 0.0
    %1881 = vmatpush1.msra.mxu0 0.0
    %1882 = vmatprep.mubr.f32.mxu0 %v1812
    %1883 = vmatmul.mubr.f32.gmra.mrb[0].mxu0 %v1782
    %v1884 = vpop.f32.mrb[0].mxu0
    %v1885 = vadd.f32 %v1808, %v1884
    %v1886 = vpop.f32.mrb[0].mxu0
    %1887 = vdwg.mxu0
    %v1888 = vmax.f32 %v1885, 0.0
    %v1889 = vld [vmem:[%s8] sm:$0xff]
    %v1890 = vld [vmem:[%s8 + $0x8] sm:$0xff]
    %v1891 = vld [vmem:[%s8 + $0x10] sm:$0xff]
    %v1892 = vld [vmem:[%s8 + $0x18] sm:$0xff]
    %v1893 = vld [vmem:[%s8 + $0x20] sm:$0xff]
    %v1894 = vld [vmem:[%s8 + $0x28] sm:$0xff]
    %v1895 = vld [vmem:[%s8 + $0x30] sm:$0x3]
    %v1896 = vld [vmem:[%s9] sm:$0x1]
    %v1898 = vlaneseq
    %v1899 = vshrl.u32 %v1898, 7
    %v1900 = vsub.s32 0, %v1899
    %v1901 = vrot.slane %v1896, %v1900
    %vm1903 = vcmask 408576
    %v1905 = vsel %vm1903, %v1888, 0
    %vm1907 = vcmask 1041408
    %v1909 = vsel %vm1907, %v1895, 0
    %1911 = vmatprep.subr.mxu0 0.0
    %1912 = vmatpush1.msra.mxu0 %v1889
    %1913 = vmatprep.subr.mxu0 0.0
    %1914 = vmatpush1.msra.mxu0 %v1890
    %1915 = vmatprep.subr.mxu0 0.0
    %1916 = vmatpush1.msra.mxu0 %v1891
    %1917 = vmatprep.subr.mxu0 0.0
    %1918 = vmatpush1.msra.mxu0 %v1892
    %1919 = vmatprep.subr.mxu0 0.0
    %1920 = vmatpush1.msra.mxu0 %v1893
    %1921 = vmatprep.subr.mxu0 0.0
    %1922 = vmatpush1.msra.mxu0 %v1894
    %1923 = vmatprep.subr.mxu0 0.0
    %1924 = vmatpush1.msra.mxu0 %v1909
    %1925 = vmatprep.subr.mxu0 0.0
    %1926 = vmatpush1.msra.mxu0 0.0
    %1927 = vmatprep.subr.mxu0 0.0
    %1928 = vmatpush1.msra.mxu0 0.0
    %1929 = vmatprep.subr.mxu0 0.0
    %1930 = vmatpush1.msra.mxu0 0.0
    %1931 = vmatprep.subr.mxu0 0.0
    %1932 = vmatpush1.msra.mxu0 0.0
    %1933 = vmatprep.subr.mxu0 0.0
    %1934 = vmatpush1.msra.mxu0 0.0
    %1935 = vmatprep.subr.mxu0 0.0
    %1936 = vmatpush1.msra.mxu0 0.0
    %1937 = vmatprep.subr.mxu0 0.0
    %1938 = vmatpush1.msra.mxu0 0.0
    %1939 = vmatprep.subr.mxu0 0.0
    %1940 = vmatpush1.msra.mxu0 0.0
    %1941 = vmatprep.subr.mxu0 0.0
    %1942 = vmatpush1.msra.mxu0 0.0
    %1943 = vmatprep.subr.mxu0 0.0
    %1944 = vmatpush1.msra.mxu0 0.0
    %1945 = vmatprep.subr.mxu0 0.0
    %1946 = vmatpush1.msra.mxu0 0.0
    %1947 = vmatprep.subr.mxu0 0.0
    %1948 = vmatpush1.msra.mxu0 0.0
    %1949 = vmatprep.subr.mxu0 0.0
    %1950 = vmatpush1.msra.mxu0 0.0
    %1951 = vmatprep.subr.mxu0 0.0
    %1952 = vmatpush1.msra.mxu0 0.0
    %1953 = vmatprep.subr.mxu0 0.0
    %1954 = vmatpush1.msra.mxu0 0.0
    %1955 = vmatprep.subr.mxu0 0.0
    %1956 = vmatpush1.msra.mxu0 0.0
    %1957 = vmatprep.subr.mxu0 0.0
    %1958 = vmatpush1.msra.mxu0 0.0
    %1959 = vmatprep.subr.mxu0 0.0
    %1960 = vmatpush1.msra.mxu0 0.0
    %1961 = vmatprep.subr.mxu0 0.0
    %1962 = vmatpush1.msra.mxu0 0.0
    %1963 = vmatprep.subr.mxu0 0.0
    %1964 = vmatpush1.msra.mxu0 0.0
    %1965 = vmatprep.subr.mxu0 0.0
    %1966 = vmatpush1.msra.mxu0 0.0
    %1967 = vmatprep.subr.mxu0 0.0
    %1968 = vmatpush1.msra.mxu0 0.0
    %1969 = vmatprep.subr.mxu0 0.0
    %1970 = vmatpush1.msra.mxu0 0.0
    %1971 = vmatprep.subr.mxu0 0.0
    %1972 = vmatpush1.msra.mxu0 0.0
    %1973 = vmatprep.subr.mxu0 0.0
    %1974 = vmatpush1.msra.mxu0 0.0
    %1975 = vmatprep.mubr.f32.mxu0 0.0
    %1976 = vmatmul.mubr.f32.gmra.mrb[0].mxu0 %v1905
    %v1977 = vpop.f32.mrb[0].mxu0
    %v1978 = vadd.f32 %v1901, %v1977
    %v1979 = vpop.f32.mrb[0].mxu0
    %1980 = vdwg.mxu0
    %vm1981 = vcmask 9216
    %1982 = vst.msk [vmem:[#allocation2] sm:$0x3] %vm1981, %v1978
    // Predicated region
    $region42: #{tpu_custom_call.1} parent=1 // pred_check
      _
    $region43: #{tpu_custom_call.1} parent=1 // pred_check_branch
      %1984 = sbr.rel (0) target = $region45
    $region44: #{tpu_custom_call.1} parent=1 // pred_region
      %s1986 = ssub.s32 32, 32
      %1987 = vsyncadd [#allocation3], %s1986
      %s1989 = sshll.u32 [#allocation2], 4
      %s1990 = int_to_ptr.vmem [resolvable:$true] %s1989
      %1992 = dma.vmem_to_hbm [thread:$0]  %s1990, 32, %s10, [#allocation3]
    $region45: #{tpu_custom_call.1} parent=1 // pred_fallthru
      _
    // Predicated region
    $region46: #{tpu_custom_call.1} parent=1 // pred_check
      _
    $region47: #{tpu_custom_call.1} parent=1 // pred_check_branch
      %1994 = sbr.rel (0) target = $region49
    $region48: #{tpu_custom_call.1} parent=1 // pred_region
      %1995 = dma.done [#allocation3], 32
    $region49: #{tpu_custom_call.1} parent=1 // pred_fallthru
      _
    %1996 = vsyncpa [#allocation3], 1

</llo_original>
